<compile_context>
chip_gen: v6e
topology: v6e:2x2x1
jax: 0.10.0
libtpu: 0.0.40
codegen_flags: <defaults>
</compile_context>

<pallas_src>
import jax
import jax.numpy as jnp
from jax.experimental import pallas as pl
from jax.experimental.pallas import tpu as pltpu


def _round_up(x, m):
    return (x + m - 1) // m * m


def _pick_band_rows(h, target):
    th = min(h, max(1, target))
    while h % th:
        th -= 1
    return th


def bottleneck_kernel(x_hbm, w1_ref, w2_ref, w3_ref, b1_ref, b2_ref, b3_ref,
                      out_ref, xbuf, hpad, sem):
    n = pl.program_id(0)
    hb = pl.program_id(1)

    _, TH, W, C4p = out_ref.shape
    Cp = xbuf.shape[-1]
    Pp = w1_ref.shape[1]
    H = pl.num_programs(1) * TH          # full (unpadded) image height
    cdt = xbuf.dtype                     # MXU compute dtype (f32 or bf16)

    # ---- fetch this row band (+1 halo row top/bottom) from HBM.
    #      x_hbm is (N, H+2, W, Cp): wrapper pre-padded H with zero rows.
    copy = pltpu.make_async_copy(x_hbm.at[n, pl.ds(hb * TH, TH + 2)], xbuf, sem)
    copy.start()
    copy.wait()

    # ---- conv1 (1x1, BN1 scale folded into weights) + bias + relu,
    #      computed for all TH+2 rows (halo rows included).
    x2d = xbuf[...].reshape((TH + 2) * W, Cp)
    h1 = jnp.dot(x2d, w1_ref[...], preferred_element_type=jnp.float32)
    h1 = jnp.maximum(h1 + b1_ref[...], 0.0).reshape(TH + 2, W, Pp)

    # conv2's zero padding applies to conv1's *output*: halo rows that fall
    # outside the real image must be exactly 0 (not relu(bias)).
    row = jax.lax.broadcasted_iota(jnp.int32, (TH + 2, 1, 1), 0) + hb * TH - 1
    h1 = jnp.where((row >= 0) & (row < H), h1, 0.0)

    # ---- build the W-padded slab; zero only the two halo columns.
    zcol = jnp.zeros((TH + 2, 1, Pp), jnp.float32)
    hpad[:, 0:1, :] = zcol
    hpad[:, W + 1:W + 2, :] = zcol
    hpad[:, 1:W + 1, :] = h1

    # ---- conv2 (3x3, stride=1, dilation=1) as one im2col matmul, K = 9*Pp.
    cols = []
    for k in range(9):                   # static unroll (9 taps)
        ky, kx = k // 3, k % 3
        cols.append(hpad[ky:ky + TH, kx:kx + W, :].reshape(TH * W, Pp))
    slab = jnp.concatenate(cols, axis=-1).astype(cdt)          # (TH*W, 9*Pp)
    h2 = jnp.dot(slab, w2_ref[...], preferred_element_type=jnp.float32)
    h2 = jnp.maximum(h2 + b2_ref[...], 0.0).astype(cdt)

    # ---- conv3 (1x1, BN3 scale folded) + bias.
    h3 = jnp.dot(h2, w3_ref[...], preferred_element_type=jnp.float32)
    h3 = h3 + b3_ref[...]

    # ---- residual add (downsample=None => Cin == planes*4 == C4p) + relu.
    res = xbuf[1:TH + 1, :, :].reshape(TH * W, Cp).astype(jnp.float32)
    out = jnp.maximum(h3 + res, 0.0)
    out_ref[...] = out.reshape(1, TH, W, C4p).astype(out_ref.dtype)


def bottleneck_forward(x_nchw, params, compute_dtype=jnp.float32, band_rows=32):
    """x_nchw: (N, C, H, W) with C == planes * 4. Returns NCHW output."""
    x = jnp.transpose(x_nchw, (0, 2, 3, 1))   # -> NHWC
    N, H, W, Cin = x.shape
    P = params["w1"].shape[1]
    C4 = params["w3"].shape[1]
    assert Cin == C4, "downsample=None requires inplanes == planes*expansion"

    Cp = _round_up(Cin, 128)
    Pp = _round_up(P, 128)
    C4p = _round_up(C4, 128)

    # Fold BN scales into conv weights (output-channel scaling), zero-pad all
    # channel dims to multiples of 128 (lane-dense), cast MXU operands.
    w1 = params["w1"] * params["s1"]                 # (Cin, P)
    w2 = params["w2"] * params["s2"][None]           # (9, P, P)
    w3 = params["w3"] * params["s3"]                 # (P, C4)

    w1p = jnp.zeros((Cp, Pp), jnp.float32).at[:Cin, :P].set(w1)
    w2p = jnp.zeros((9, Pp, Pp), jnp.float32).at[:, :P, :P].set(w2)
    w2p = w2p.reshape(9 * Pp, Pp)
    w3p = jnp.zeros((Pp, C4p), jnp.float32).at[:P, :C4].set(w3)
    w1p = w1p.astype(compute_dtype)
    w2p = w2p.astype(compute_dtype)
    w3p = w3p.astype(compute_dtype)

    b1p = jnp.zeros((1, Pp), jnp.float32).at[:, :P].set(params["b1"])
    b2p = jnp.zeros((1, Pp), jnp.float32).at[:, :P].set(params["b2"])
    b3p = jnp.zeros((1, C4p), jnp.float32).at[:, :C4].set(params["b3"])

    # Pad input: channels -> Cp, H -> +1 zero row top & bottom (halo source).
    xp = jnp.zeros((N, H + 2, W, Cp), compute_dtype)
    xp = xp.at[:, 1:H + 1, :, :Cin].set(x.astype(compute_dtype))

    TH = _pick_band_rows(H, band_rows)
    n_hb = H // TH

    out = pl.pallas_call(
        bottleneck_kernel,
        out_shape=jax.ShapeDtypeStruct((N, H, W, C4p), x_nchw.dtype),
        grid=(N, n_hb),
        in_specs=[
            pl.BlockSpec(memory_space=pl.ANY),                    # x (HBM)
            pl.BlockSpec((Cp, Pp), lambda n, h: (0, 0)),          # w1
            pl.BlockSpec((9 * Pp, Pp), lambda n, h: (0, 0)),      # w2 (im2col)
            pl.BlockSpec((Pp, C4p), lambda n, h: (0, 0)),         # w3
            pl.BlockSpec((1, Pp), lambda n, h: (0, 0)),           # b1
            pl.BlockSpec((1, Pp), lambda n, h: (0, 0)),           # b2
            pl.BlockSpec((1, C4p), lambda n, h: (0, 0)),          # b3
        ],
        out_specs=pl.BlockSpec((1, TH, W, C4p), lambda n, h: (n, h, 0, 0)),
        scratch_shapes=[
            pltpu.VMEM((TH + 2, W, Cp), compute_dtype),           # x band + halo
            pltpu.VMEM((TH + 2, W + 2, Pp), jnp.float32),         # padded conv1 out
            pltpu.SemaphoreType.DMA,
        ],
        compiler_params=pltpu.CompilerParams(
            dimension_semantics=("parallel", "parallel"),
            vmem_limit_bytes=64 * 1024 * 1024,
        ),
    )(xp, w1p, w2p, w3p, b1p, b2p, b3p)

    out = out[..., :C4]
    return jnp.transpose(out, (0, 3, 1, 2))   # -> NCHW


def make_params(key, inplanes, planes, eps=1e-5):
    """Deterministic parameter init matching Bottleneck.__init__ shapes."""
    C4 = planes * 4
    ks = jax.random.split(key, 9)

    # PyTorch conv weights are (out, in, kh, kw); convert to matmul layouts.
    w1_t = jax.random.normal(ks[0], (planes, inplanes, 1, 1), jnp.float32) * 0.1
    w2_t = jax.random.normal(ks[1], (planes, planes, 3, 3), jnp.float32) * 0.1
    w3_t = jax.random.normal(ks[2], (C4, planes, 1, 1), jnp.float32) * 0.1

    w1 = jnp.transpose(w1_t[:, :, 0, 0], (1, 0))                       # (Cin, P)
    w2 = jnp.transpose(w2_t, (2, 3, 1, 0)).reshape(9, planes, planes)  # (9, Pin, Pout)
    w3 = jnp.transpose(w3_t[:, :, 0, 0], (1, 0))                       # (P, 4P)

    def folded_bn(kg, kb, c):
        gamma = 1.0 + 0.1 * jax.random.normal(kg, (c,), jnp.float32)
        beta = 0.1 * jax.random.normal(kb, (c,), jnp.float32)
        running_mean = jnp.zeros((c,), jnp.float32)
        running_var = jnp.ones((c,), jnp.float32)
        scale = gamma / jnp.sqrt(running_var + eps)
        bias = beta - running_mean * scale
        return scale.reshape(1, c), bias.reshape(1, c)

    s1, b1 = folded_bn(ks[3], ks[4], planes)
    s2, b2 = folded_bn(ks[5], ks[6], planes)
    s3, b3 = folded_bn(ks[7], ks[8], C4)

    return dict(w1=w1, w2=w2, w3=w3, s1=s1, b1=b1, s2=s2, b2=b2, s3=s3, b3=b3)


def bottleneck_reference(x_nchw, params):
    """Pure-JAX reference (NHWC convs) for correctness checking."""
    x = jnp.transpose(x_nchw, (0, 2, 3, 1))
    P = params["w1"].shape[1]
    dn = ("NHWC", "HWIO", "NHWC")

    w1 = params["w1"].reshape(1, 1, -1, P)
    w2 = params["w2"].reshape(3, 3, P, P)
    w3 = params["w3"].reshape(1, 1, P, -1)

    h = jax.lax.conv_general_dilated(x, w1, (1, 1), "VALID", dimension_numbers=dn)
    h = jnp.maximum(h * params["s1"][0] + params["b1"][0], 0.0)
    h = jax.lax.conv_general_dilated(h, w2, (1, 1), ((1, 1), (1, 1)),
                                     dimension_numbers=dn)
    h = jnp.maximum(h * params["s2"][0] + params["b2"][0], 0.0)
    h = jax.lax.conv_general_dilated(h, w3, (1, 1), "VALID", dimension_numbers=dn)
    h = h * params["s3"][0] + params["b3"][0]
    out = jnp.maximum(h + x, 0.0)
    return jnp.transpose(out, (0, 3, 1, 2))


if __name__ == "__main__":
    key = jax.random.PRNGKey(0)
    kx, kp = jax.random.split(key)

    planes = 4
    inplanes = planes * 4          # 16, so residual add is valid (no downsample)
    N, H, W = 2, 16, 16

    x = jax.random.normal(kx, (N, inplanes, H, W), jnp.float32)
    params = make_params(kp, inplanes, planes)

    ref = bottleneck_reference(x, params)

    # f32 compute path (strict check), band_rows=8 exercises the H-band halo.
    out = bottleneck_forward(x, params, compute_dtype=jnp.float32, band_rows=8)
    out = jax.block_until_ready(out)
    assert out.shape == (N, inplanes, H, W)
    assert jnp.allclose(out, ref, atol=1e-3, rtol=1e-3), "f32 mismatch vs reference"

    # bf16 MXU path (f32 accumulation/epilogue), looser tolerance.
    out_bf16 = bottleneck_forward(x, params, compute_dtype=jnp.bfloat16, band_rows=8)
    out_bf16 = jax.block_until_ready(out_bf16)
    assert jnp.allclose(out_bf16, ref, atol=5e-2, rtol=5e-2), "bf16 mismatch vs reference"

    print("KERNEL_OK")
</pallas_src>

<mosaic_0001>
module attributes {stable_mosaic.version = 11 : i64} {
  func.func @bottleneck_kernel(%arg0: i32, %arg1: i32, %arg2: memref<2x18x16x128xf32, #tpu.memory_space<any>>, %arg3: memref<128x128xf32, #tpu.memory_space<vmem>>, %arg4: memref<1152x128xf32, #tpu.memory_space<vmem>>, %arg5: memref<128x128xf32, #tpu.memory_space<vmem>>, %arg6: memref<1x128xf32, #tpu.memory_space<vmem>>, %arg7: memref<1x128xf32, #tpu.memory_space<vmem>>, %arg8: memref<1x128xf32, #tpu.memory_space<vmem>>, %arg9: memref<1x8x16x128xf32, #tpu.memory_space<vmem>>, %arg10: memref<10x16x128xf32, #tpu.memory_space<vmem>>, %arg11: memref<10x18x128xf32, #tpu.memory_space<vmem>>, %arg12: memref<!tpu.dma_semaphore, #tpu.memory_space<semaphore_mem>>) attributes {dimension_semantics = [#tpu.dimension_semantics<parallel>, #tpu.dimension_semantics<parallel>], iteration_bounds = array<i64: 2, 2>, scalar_prefetch = 0 : i64, scratch_operands = 3 : i64, tpu.core_type = #tpu.core_type<tc>, window_params = [{}, {pipeline_mode = #tpu.pipeline_mode<synchronous>, transform_indices = @transform_1, window_bounds = array<i64: 128, 128>}, {pipeline_mode = #tpu.pipeline_mode<synchronous>, transform_indices = @transform_2, window_bounds = array<i64: 1152, 128>}, {pipeline_mode = #tpu.pipeline_mode<synchronous>, transform_indices = @transform_3, window_bounds = array<i64: 128, 128>}, {pipeline_mode = #tpu.pipeline_mode<synchronous>, transform_indices = @transform_4, window_bounds = array<i64: 1, 128>}, {pipeline_mode = #tpu.pipeline_mode<synchronous>, transform_indices = @transform_5, window_bounds = array<i64: 1, 128>}, {pipeline_mode = #tpu.pipeline_mode<synchronous>, transform_indices = @transform_6, window_bounds = array<i64: 1, 128>}, {transform_indices = @transform_7, window_bounds = array<i64: 1, 8, 16, 128>}]} {
    %c8_i32 = arith.constant 8 : i32
    %0 = arith.muli %arg1, %c8_i32 : i32
    %c0_i32 = arith.constant 0 : i32
    %c0_i32_0 = arith.constant 0 : i32
    %1 = tpu.memref_slice %arg2[%arg0, %0, %c0_i32, %c0_i32_0] : memref<2x18x16x128xf32, #tpu.memory_space<any>> -> memref<1x10x16x128xf32, #tpu.memory_space<any>>
    %2 = tpu.memref_squeeze %1 : memref<1x10x16x128xf32, #tpu.memory_space<any>> -> memref<10x16x128xf32, #tpu.memory_space<any>>
    tpu.enqueue_dma source(%2 : memref<10x16x128xf32, #tpu.memory_space<any>>) target(%arg10 : memref<10x16x128xf32, #tpu.memory_space<vmem>>) target_semaphore(%arg12 : memref<!tpu.dma_semaphore, #tpu.memory_space<semaphore_mem>>)
    %c0_i32_1 = arith.constant 0 : i32
    %c0_i32_2 = arith.constant 0 : i32
    %3 = tpu.memref_slice %arg2[%arg0, %0, %c0_i32_1, %c0_i32_2] : memref<2x18x16x128xf32, #tpu.memory_space<any>> -> memref<1x10x16x128xf32, #tpu.memory_space<any>>
    %4 = tpu.memref_squeeze %3 : memref<1x10x16x128xf32, #tpu.memory_space<any>> -> memref<10x16x128xf32, #tpu.memory_space<any>>
    tpu.wait_dma2 semaphore(%arg12 : memref<!tpu.dma_semaphore, #tpu.memory_space<semaphore_mem>>) src(%4 : memref<10x16x128xf32, #tpu.memory_space<any>>) dst(%arg10 : memref<10x16x128xf32, #tpu.memory_space<vmem>>)
    %c0 = arith.constant 0 : index
    %c0_3 = arith.constant 0 : index
    %c0_4 = arith.constant 0 : index
    %5 = vector.load %arg10[%c0, %c0_3, %c0_4] : memref<10x16x128xf32, #tpu.memory_space<vmem>>, vector<10x16x128xf32>
    %6 = vector.shape_cast %5 : vector<10x16x128xf32> to vector<160x128xf32>
    %c0_5 = arith.constant 0 : index
    %c0_6 = arith.constant 0 : index
    %7 = vector.load %arg3[%c0_5, %c0_6] : memref<128x128xf32, #tpu.memory_space<vmem>>, vector<128x128xf32>
    %cst = arith.constant dense<0.000000e+00> : vector<160x128xf32>
    %8 = tpu.matmul %6, %7, %cst {dimension_numbers = #tpu.dot_dimension_numbers<[1], [0], [0], [1], [0, 0, 1, 1], [], []>} : vector<160x128xf32>, vector<128x128xf32>, vector<160x128xf32> -> vector<160x128xf32>
    %c0_7 = arith.constant 0 : index
    %c0_8 = arith.constant 0 : index
    %9 = vector.load %arg6[%c0_7, %c0_8] : memref<1x128xf32, #tpu.memory_space<vmem>>, vector<1x128xf32>
    %10 = vector.broadcast %9 : vector<1x128xf32> to vector<160x128xf32>
    %11 = arith.addf %8, %10 : vector<160x128xf32>
    %cst_9 = arith.constant 0.000000e+00 : f32
    %12 = vector.broadcast %cst_9 : f32 to vector<160x128xf32>
    %13 = arith.maximumf %11, %12 : vector<160x128xf32>
    %14 = vector.shape_cast %13 : vector<160x128xf32> to vector<10x16x128xf32>
    %15 = tpu.iota {dimensions = array<i32: 0>} : vector<10x1x1xi32>
    %c8_i32_10 = arith.constant 8 : i32
    %16 = arith.muli %arg1, %c8_i32_10 : i32
    %17 = vector.broadcast %16 : i32 to vector<10x1x1xi32>
    %18 = arith.addi %15, %17 : vector<10x1x1xi32>
    %c1_i32 = arith.constant 1 : i32
    %19 = vector.broadcast %c1_i32 : i32 to vector<10x1x1xi32>
    %20 = arith.subi %18, %19 : vector<10x1x1xi32>
    %c0_i32_11 = arith.constant 0 : i32
    %21 = vector.broadcast %c0_i32_11 : i32 to vector<10x1x1xi32>
    %22 = arith.cmpi sge, %20, %21 : vector<10x1x1xi32>
    %c16_i32 = arith.constant 16 : i32
    %23 = vector.broadcast %c16_i32 : i32 to vector<10x1x1xi32>
    %24 = arith.cmpi slt, %20, %23 : vector<10x1x1xi32>
    %25 = arith.andi %22, %24 : vector<10x1x1xi1>
    %cst_12 = arith.constant 0.000000e+00 : f32
    %26 = vector.shape_cast %25 : vector<10x1x1xi1> to vector<10x1x1xi1>
    %27 = vector.broadcast %26 : vector<10x1x1xi1> to vector<10x16x128xi1>
    %28 = vector.broadcast %cst_12 : f32 to vector<10x16x128xf32>
    %29 = arith.select %27, %14, %28 : vector<10x16x128xi1>, vector<10x16x128xf32>
    %cst_13 = arith.constant 0.000000e+00 : f32
    %30 = vector.broadcast %cst_13 : f32 to vector<10x1x128xf32>
    %c0_14 = arith.constant 0 : index
    %c0_15 = arith.constant 0 : index
    %c0_16 = arith.constant 0 : index
    %31 = vector.load %arg11[%c0_14, %c0_15, %c0_16] : memref<10x18x128xf32, #tpu.memory_space<vmem>>, vector<10x1x128xf32>
    tpu.vector_store %arg11[%c0_14, %c0_15, %c0_16], %30 {strides = array<i32>} : memref<10x18x128xf32, #tpu.memory_space<vmem>>, vector<10x1x128xf32>,
    %c0_17 = arith.constant 0 : index
    %c17 = arith.constant 17 : index
    %c0_18 = arith.constant 0 : index
    %32 = vector.load %arg11[%c0_17, %c17, %c0_18] : memref<10x18x128xf32, #tpu.memory_space<vmem>>, vector<10x1x128xf32>
    tpu.vector_store %arg11[%c0_17, %c17, %c0_18], %30 {strides = array<i32>} : memref<10x18x128xf32, #tpu.memory_space<vmem>>, vector<10x1x128xf32>,
    %c0_19 = arith.constant 0 : index
    %c1 = arith.constant 1 : index
    %c0_20 = arith.constant 0 : index
    %33 = vector.load %arg11[%c0_19, %c1, %c0_20] : memref<10x18x128xf32, #tpu.memory_space<vmem>>, vector<10x16x128xf32>
    tpu.vector_store %arg11[%c0_19, %c1, %c0_20], %29 {strides = array<i32>} : memref<10x18x128xf32, #tpu.memory_space<vmem>>, vector<10x16x128xf32>,
    %c0_21 = arith.constant 0 : index
    %c0_22 = arith.constant 0 : index
    %c0_23 = arith.constant 0 : index
    %34 = vector.load %arg11[%c0_21, %c0_22, %c0_23] : memref<10x18x128xf32, #tpu.memory_space<vmem>>, vector<8x16x128xf32>
    %35 = vector.shape_cast %34 : vector<8x16x128xf32> to vector<128x128xf32>
    %c0_24 = arith.constant 0 : index
    %c1_25 = arith.constant 1 : index
    %c0_26 = arith.constant 0 : index
    %36 = vector.load %arg11[%c0_24, %c1_25, %c0_26] : memref<10x18x128xf32, #tpu.memory_space<vmem>>, vector<8x16x128xf32>
    %37 = vector.shape_cast %36 : vector<8x16x128xf32> to vector<128x128xf32>
    %c0_27 = arith.constant 0 : index
    %c2 = arith.constant 2 : index
    %c0_28 = arith.constant 0 : index
    %38 = vector.load %arg11[%c0_27, %c2, %c0_28] : memref<10x18x128xf32, #tpu.memory_space<vmem>>, vector<8x16x128xf32>
    %39 = vector.shape_cast %38 : vector<8x16x128xf32> to vector<128x128xf32>
    %c1_29 = arith.constant 1 : index
    %c0_30 = arith.constant 0 : index
    %c0_31 = arith.constant 0 : index
    %40 = vector.load %arg11[%c1_29, %c0_30, %c0_31] : memref<10x18x128xf32, #tpu.memory_space<vmem>>, vector<8x16x128xf32>
    %41 = vector.shape_cast %40 : vector<8x16x128xf32> to vector<128x128xf32>
    %c1_32 = arith.constant 1 : index
    %c1_33 = arith.constant 1 : index
    %c0_34 = arith.constant 0 : index
    %42 = vector.load %arg11[%c1_32, %c1_33, %c0_34] : memref<10x18x128xf32, #tpu.memory_space<vmem>>, vector<8x16x128xf32>
    %43 = vector.shape_cast %42 : vector<8x16x128xf32> to vector<128x128xf32>
    %c1_35 = arith.constant 1 : index
    %c2_36 = arith.constant 2 : index
    %c0_37 = arith.constant 0 : index
    %44 = vector.load %arg11[%c1_35, %c2_36, %c0_37] : memref<10x18x128xf32, #tpu.memory_space<vmem>>, vector<8x16x128xf32>
    %45 = vector.shape_cast %44 : vector<8x16x128xf32> to vector<128x128xf32>
    %c2_38 = arith.constant 2 : index
    %c0_39 = arith.constant 0 : index
    %c0_40 = arith.constant 0 : index
    %46 = vector.load %arg11[%c2_38, %c0_39, %c0_40] : memref<10x18x128xf32, #tpu.memory_space<vmem>>, vector<8x16x128xf32>
    %47 = vector.shape_cast %46 : vector<8x16x128xf32> to vector<128x128xf32>
    %c2_41 = arith.constant 2 : index
    %c1_42 = arith.constant 1 : index
    %c0_43 = arith.constant 0 : index
    %48 = vector.load %arg11[%c2_41, %c1_42, %c0_43] : memref<10x18x128xf32, #tpu.memory_space<vmem>>, vector<8x16x128xf32>
    %49 = vector.shape_cast %48 : vector<8x16x128xf32> to vector<128x128xf32>
    %c2_44 = arith.constant 2 : index
    %c2_45 = arith.constant 2 : index
    %c0_46 = arith.constant 0 : index
    %50 = vector.load %arg11[%c2_44, %c2_45, %c0_46] : memref<10x18x128xf32, #tpu.memory_space<vmem>>, vector<8x16x128xf32>
    %51 = vector.shape_cast %50 : vector<8x16x128xf32> to vector<128x128xf32>
    %52 = tpu.concatenate %35, %37, %39, %41, %43, %45, %47, %49, %51 in 1 : vector<128x128xf32>, vector<128x128xf32>, vector<128x128xf32>, vector<128x128xf32>, vector<128x128xf32>, vector<128x128xf32>, vector<128x128xf32>, vector<128x128xf32>, vector<128x128xf32> -> vector<128x1152xf32>
    %c0_47 = arith.constant 0 : index
    %c0_48 = arith.constant 0 : index
    %53 = vector.load %arg4[%c0_47, %c0_48] : memref<1152x128xf32, #tpu.memory_space<vmem>>, vector<1152x128xf32>
    %cst_49 = arith.constant dense<0.000000e+00> : vector<128x128xf32>
    %54 = tpu.matmul %52, %53, %cst_49 {dimension_numbers = #tpu.dot_dimension_numbers<[1], [0], [0], [1], [0, 0, 1, 1], [], []>} : vector<128x1152xf32>, vector<1152x128xf32>, vector<128x128xf32> -> vector<128x128xf32>
    %c0_50 = arith.constant 0 : index
    %c0_51 = arith.constant 0 : index
    %55 = vector.load %arg7[%c0_50, %c0_51] : memref<1x128xf32, #tpu.memory_space<vmem>>, vector<1x128xf32>
    %56 = vector.broadcast %55 : vector<1x128xf32> to vector<128x128xf32>
    %57 = arith.addf %54, %56 : vector<128x128xf32>
    %cst_52 = arith.constant 0.000000e+00 : f32
    %58 = vector.broadcast %cst_52 : f32 to vector<128x128xf32>
    %59 = arith.maximumf %57, %58 : vector<128x128xf32>
    %c0_53 = arith.constant 0 : index
    %c0_54 = arith.constant 0 : index
    %60 = vector.load %arg5[%c0_53, %c0_54] : memref<128x128xf32, #tpu.memory_space<vmem>>, vector<128x128xf32>
    %cst_55 = arith.constant dense<0.000000e+00> : vector<128x128xf32>
    %61 = tpu.matmul %59, %60, %cst_55 {dimension_numbers = #tpu.dot_dimension_numbers<[1], [0], [0], [1], [0, 0, 1, 1], [], []>} : vector<128x128xf32>, vector<128x128xf32>, vector<128x128xf32> -> vector<128x128xf32>
    %c0_56 = arith.constant 0 : index
    %c0_57 = arith.constant 0 : index
    %62 = vector.load %arg8[%c0_56, %c0_57] : memref<1x128xf32, #tpu.memory_space<vmem>>, vector<1x128xf32>
    %63 = vector.broadcast %62 : vector<1x128xf32> to vector<128x128xf32>
    %64 = arith.addf %61, %63 : vector<128x128xf32>
    %c1_58 = arith.constant 1 : index
    %c0_59 = arith.constant 0 : index
    %c0_60 = arith.constant 0 : index
    %65 = vector.load %arg10[%c1_58, %c0_59, %c0_60] : memref<10x16x128xf32, #tpu.memory_space<vmem>>, vector<8x16x128xf32>
    %66 = vector.shape_cast %65 : vector<8x16x128xf32> to vector<128x128xf32>
    %67 = arith.addf %64, %66 : vector<128x128xf32>
    %cst_61 = arith.constant 0.000000e+00 : f32
    %68 = vector.broadcast %cst_61 : f32 to vector<128x128xf32>
    %69 = arith.maximumf %67, %68 : vector<128x128xf32>
    %70 = vector.shape_cast %69 : vector<128x128xf32> to vector<1x8x16x128xf32>
    %c0_62 = arith.constant 0 : index
    %c0_63 = arith.constant 0 : index
    %c0_64 = arith.constant 0 : index
    %c0_65 = arith.constant 0 : index
    %71 = vector.load %arg9[%c0_62, %c0_63, %c0_64, %c0_65] : memref<1x8x16x128xf32, #tpu.memory_space<vmem>>, vector<1x8x16x128xf32>
    tpu.vector_store %arg9[%c0_62, %c0_63, %c0_64, %c0_65], %70 {strides = array<i32>} : memref<1x8x16x128xf32, #tpu.memory_space<vmem>>, vector<1x8x16x128xf32>,
    return
  }
  func.func @transform_1(%arg0: i32, %arg1: i32) -> (i32, i32) {
    %c0_i32 = arith.constant 0 : i32
    %c0_i32_0 = arith.constant 0 : i32
    %c0_i32_1 = arith.constant 0 : i32
    return %c0_i32, %c0_i32_0 : i32, i32
  }
  func.func @transform_2(%arg0: i32, %arg1: i32) -> (i32, i32) {
    %c0_i32 = arith.constant 0 : i32
    %c0_i32_0 = arith.constant 0 : i32
    %c0_i32_1 = arith.constant 0 : i32
    return %c0_i32, %c0_i32_0 : i32, i32
  }
  func.func @transform_3(%arg0: i32, %arg1: i32) -> (i32, i32) {
    %c0_i32 = arith.constant 0 : i32
    %c0_i32_0 = arith.constant 0 : i32
    %c0_i32_1 = arith.constant 0 : i32
    return %c0_i32, %c0_i32_0 : i32, i32
  }
  func.func @transform_4(%arg0: i32, %arg1: i32) -> (i32, i32) {
    %c0_i32 = arith.constant 0 : i32
    %c0_i32_0 = arith.constant 0 : i32
    %c0_i32_1 = arith.constant 0 : i32
    return %c0_i32, %c0_i32_0 : i32, i32
  }
  func.func @transform_5(%arg0: i32, %arg1: i32) -> (i32, i32) {
    %c0_i32 = arith.constant 0 : i32
    %c0_i32_0 = arith.constant 0 : i32
    %c0_i32_1 = arith.constant 0 : i32
    return %c0_i32, %c0_i32_0 : i32, i32
  }
  func.func @transform_6(%arg0: i32, %arg1: i32) -> (i32, i32) {
    %c0_i32 = arith.constant 0 : i32
    %c0_i32_0 = arith.constant 0 : i32
    %c0_i32_1 = arith.constant 0 : i32
    return %c0_i32, %c0_i32_0 : i32, i32
  }
  func.func @transform_7(%arg0: i32, %arg1: i32) -> (i32, i32, i32, i32) {
    %c0_i32 = arith.constant 0 : i32
    %c0_i32_0 = arith.constant 0 : i32
    %c0_i32_1 = arith.constant 0 : i32
    return %arg0, %arg1, %c0_i32, %c0_i32_0 : i32, i32, i32, i32
  }
}

</mosaic_0001>

<llo_original>
// kernel: tpu_custom_call.1
$region0: #{tpu_custom_call.1}
  #allocation0 [shape = 'u32[]', space=smem, size = 0x4, offset = 0x4, fixed_abs, tag = 'smem constant byte address 0x4 - core index']
  #allocation1 [shape = 'u32[144,128]{1,0:T(1,128)}', space=vmem, size = 0x12000, scoped, tag = 'internal scratch']
  #allocation2 [shape = 'f32[10,16,128]{2,1,0:T(8,128)}', space=vmem, size = 0x14000, scoped, tag = 'scratch operand']
  #allocation3 [shape = 'f32[10,18,128]{2,1,0:T(8,128)}', space=vmem, size = 0x1e000, scoped, tag = 'scratch operand']
  #allocation4 [shape = 's32[1]{0}', space=sflag, size = 0x4, scoped, tag = 'scratch operand']
  #allocation12 [shape = 's32[]', space=sflag, size = 0x4, offset = 0, fixed_abs, tag = 'sflag constant byte address 0x0 - dummy sync flag']
  #allocation13 [shape = 's32[]', space=sflag, size = 0x4, offset = 0, fixed_abs, tag = 'sflag constant byte address 0x0 - dummy sync flag']
  #allocation14 [shape = 'u32[]', space=smem, size = 0x4, offset = 0x44, fixed_abs, tag = 'smem constant byte address 0x44 - assertion arg 0']
  #allocation15 [shape = 'u32[]', space=smem, size = 0x4, offset = 0x48, fixed_abs, tag = 'smem constant byte address 0x48 - assertion arg 1']
  %s0 = inlined_call_operand.hbm [shape: f32[2,18,16,128], index: 0, kind: input, shape index: {}]
  %s1 = inlined_call_operand.hbm [shape: f32[128,128], index: 1, kind: input, shape index: {}]
  %s2 = inlined_call_operand.hbm [shape: f32[1152,128], index: 2, kind: input, shape index: {}]
  %s3 = inlined_call_operand.hbm [shape: f32[128,128], index: 3, kind: input, shape index: {}]
  %s4 = inlined_call_operand.vmem [shape: f32[1,128], index: 4, kind: input, shape index: {}]
  %s5 = inlined_call_operand.vmem [shape: f32[1,128], index: 5, kind: input, shape index: {}]
  %s6 = inlined_call_operand.vmem [shape: f32[1,128], index: 6, kind: input, shape index: {}]
  %s7 = inlined_call_operand.hbm [shape: f32[2,16,16,128], index: 7, kind: output, shape index: {}]
  %s8 = sld [smem:[#allocation0]]
  $region73: #{tpu_custom_call.1} parent=0
    _
  %s10 = ssub.s32 1, %s8
  %s11 = scalar_select 0, %s10, %s8
  $region1: #{tpu_custom_call.1} parent=0
    #allocation5 [shape = 'u8[65536]{0}', space=vmem, size = 0x10000, scoped, tag = 'input window, operand 1, single buffered']
    #allocation6 [shape = 's32[2]{0}', space=sflag, size = 0x8, scoped, tag = 'scoped memory for tpu_custom_call.1']
    #allocation7 [shape = 's32[2]{0}', space=sflag, size = 0x8, scoped, tag = 'scoped memory for tpu_custom_call.1']
    #allocation8 [shape = 'u8[589824]{0}', space=vmem, size = 0x90000, scoped, tag = 'input window, operand 2, single buffered']
    #allocation9 [shape = 's32[1]{0}', space=sflag, size = 0x4, scoped, tag = 'scoped memory for tpu_custom_call.1']
    #allocation10 [shape = 'u8[65536]{0}', space=vmem, size = 0x10000, scoped, tag = 'input window, operand 3, single buffered']
    #allocation11 [shape = 'u8[131072]{0}', space=vmem, size = 0x20000, scoped, tag = 'output window, operand 0']
    %12 = vsyncpa [#allocation6], 0
    %13 = vsyncpa [#allocation9], 0
    %14 = vsyncpa [#allocation7], 0
    %s15 = scalar_lea.sflag [#allocation7], 1
    %16 = vsyncpa %s15, 0
    loop: start=0, step=1, limit=6
    $region2: #{tpu_custom_call.1} parent=1 // loop_pre_header
      _
    $region3: #{tpu_custom_call.1} parent=1 // loop_header
      %s18 = sphi 0, %s22
      %p19 = scmp.ge.s32.totalorder %s18, 6
      %s25 = sphi 0, %s37
      %s26 = sphi 0, %s33
      %s27 = sphi 0, %s25
      %s28 = sphi 0, %s26
      %s29 = sphi 0, %s27
      %s30 = sphi 0, %s28
      %s38 = sphi 0, %s38
      %s40 = sphi 0, %s38
      %s41 = sphi 0, %s40
      %s55 = sphi 0, %s41
      %s59 = sphi 0, %s59
      %s61 = sphi 0, %s59
      %s62 = sphi 0, %s61
      %s76 = sphi 0, %s62
      %s80 = sphi 0, %s80
      %s82 = sphi 0, %s80
      %s83 = sphi 0, %s82
      %s97 = sphi 0, %s83
      %s101 = sphi 0, %s101
      %s103 = sphi 0, %s101
      %s104 = sphi 0, %s103
      %s118 = sphi 0, %s104
      %s122 = sphi 0, %s122
      %s124 = sphi 0, %s122
      %s125 = sphi 0, %s124
      %s139 = sphi 0, %s125
      %s143 = sphi 0, %s143
      %s145 = sphi 0, %s143
      %s146 = sphi 0, %s145
      %s160 = sphi 0, %s146
      %s168 = sphi 0, %s170
      %s171 = sphi 0, %s168
      %s172 = sphi 0, %s171
      %s188 = sphi 0, %s172
    $region4: #{tpu_custom_call.1} parent=1 // loop_header_branch
      %21 = sbr.rel (%p19) target = $region8
    $region5: #{tpu_custom_call.1} parent=1 // loop_body
      %s23 = ssub.s32 %s18, 1
      %s24 = ssub.s32 %s18, 2
      %s31 = sadd.s32 1, %s26
      %p32 = scmp.ge.s32.totalorder %s31, 2
      %s33 = scalar_select %p32, 0, %s31
      %s34 = sadd.s32 1, %s25
      %s35 = scalar_select %p32, %s34, %s25
      %p36 = scmp.ge.s32.totalorder %s35, 2
      %s37 = scalar_select %p36, 0, %s35
      %s39 = sadd.s32 %s38, 1
      %p42 = scmp.eq.s32.totalorder %s18, 3
      %p43 = scmp.ne.s32.totalorder %s38, %s40
      %p44 = scmp.eq.s32.totalorder %s18, 0
      %p45 = por %p43, %p44
      %p46 = scmp.ne.s32.totalorder %s38, %s40
      %p47 = scmp.eq.s32.totalorder %s23, 3
      %p48 = por %p46, %p47
      %p49 = scmp.ne.s32.totalorder %s40, %s41
      %p50 = scmp.eq.s32.totalorder %s23, 0
      %p51 = por %p49, %p50
      %p52 = scmp.ne.s32.totalorder %s40, %s41
      %p53 = scmp.eq.s32.totalorder %s24, 3
      %p54 = por %p52, %p53
      %p56 = scmp.ne.s32.totalorder %s41, %s55
      %p57 = scmp.eq.s32.totalorder %s24, 0
      %p58 = por %p56, %p57
      %s60 = sadd.s32 %s59, 1
      %p63 = scmp.eq.s32.totalorder %s18, 3
      %p64 = scmp.ne.s32.totalorder %s59, %s61
      %p65 = scmp.eq.s32.totalorder %s18, 0
      %p66 = por %p64, %p65
      %p67 = scmp.ne.s32.totalorder %s59, %s61
      %p68 = scmp.eq.s32.totalorder %s23, 3
      %p69 = por %p67, %p68
      %p70 = scmp.ne.s32.totalorder %s61, %s62
      %p71 = scmp.eq.s32.totalorder %s23, 0
      %p72 = por %p70, %p71
      %p73 = scmp.ne.s32.totalorder %s61, %s62
      %p74 = scmp.eq.s32.totalorder %s24, 3
      %p75 = por %p73, %p74
      %p77 = scmp.ne.s32.totalorder %s62, %s76
      %p78 = scmp.eq.s32.totalorder %s24, 0
      %p79 = por %p77, %p78
      %s81 = sadd.s32 %s80, 1
      %p84 = scmp.eq.s32.totalorder %s18, 3
      %p85 = scmp.ne.s32.totalorder %s80, %s82
      %p86 = scmp.eq.s32.totalorder %s18, 0
      %p87 = por %p85, %p86
      %p88 = scmp.ne.s32.totalorder %s80, %s82
      %p89 = scmp.eq.s32.totalorder %s23, 3
      %p90 = por %p88, %p89
      %p91 = scmp.ne.s32.totalorder %s82, %s83
      %p92 = scmp.eq.s32.totalorder %s23, 0
      %p93 = por %p91, %p92
      %p94 = scmp.ne.s32.totalorder %s82, %s83
      %p95 = scmp.eq.s32.totalorder %s24, 3
      %p96 = por %p94, %p95
      %p98 = scmp.ne.s32.totalorder %s83, %s97
      %p99 = scmp.eq.s32.totalorder %s24, 0
      %p100 = por %p98, %p99
      %s102 = sadd.s32 %s101, 1
      %p105 = scmp.eq.s32.totalorder %s18, 3
      %p106 = scmp.ne.s32.totalorder %s101, %s103
      %p107 = scmp.eq.s32.totalorder %s18, 0
      %p108 = por %p106, %p107
      %p109 = scmp.ne.s32.totalorder %s101, %s103
      %p110 = scmp.eq.s32.totalorder %s23, 3
      %p111 = por %p109, %p110
      %p112 = scmp.ne.s32.totalorder %s103, %s104
      %p113 = scmp.eq.s32.totalorder %s23, 0
      %p114 = por %p112, %p113
      %p115 = scmp.ne.s32.totalorder %s103, %s104
      %p116 = scmp.eq.s32.totalorder %s24, 3
      %p117 = por %p115, %p116
      %p119 = scmp.ne.s32.totalorder %s104, %s118
      %p120 = scmp.eq.s32.totalorder %s24, 0
      %p121 = por %p119, %p120
      %s123 = sadd.s32 %s122, 1
      %p126 = scmp.eq.s32.totalorder %s18, 3
      %p127 = scmp.ne.s32.totalorder %s122, %s124
      %p128 = scmp.eq.s32.totalorder %s18, 0
      %p129 = por %p127, %p128
      %p130 = scmp.ne.s32.totalorder %s122, %s124
      %p131 = scmp.eq.s32.totalorder %s23, 3
      %p132 = por %p130, %p131
      %p133 = scmp.ne.s32.totalorder %s124, %s125
      %p134 = scmp.eq.s32.totalorder %s23, 0
      %p135 = por %p133, %p134
      %p136 = scmp.ne.s32.totalorder %s124, %s125
      %p137 = scmp.eq.s32.totalorder %s24, 3
      %p138 = por %p136, %p137
      %p140 = scmp.ne.s32.totalorder %s125, %s139
      %p141 = scmp.eq.s32.totalorder %s24, 0
      %p142 = por %p140, %p141
      %s144 = sadd.s32 %s143, 1
      %p147 = scmp.eq.s32.totalorder %s18, 3
      %p148 = scmp.ne.s32.totalorder %s143, %s145
      %p149 = scmp.eq.s32.totalorder %s18, 0
      %p150 = por %p148, %p149
      %p151 = scmp.ne.s32.totalorder %s143, %s145
      %p152 = scmp.eq.s32.totalorder %s23, 3
      %p153 = por %p151, %p152
      %p154 = scmp.ne.s32.totalorder %s145, %s146
      %p155 = scmp.eq.s32.totalorder %s23, 0
      %p156 = por %p154, %p155
      %p157 = scmp.ne.s32.totalorder %s145, %s146
      %p158 = scmp.eq.s32.totalorder %s24, 3
      %p159 = por %p157, %p158
      %p161 = scmp.ne.s32.totalorder %s146, %s160
      %p162 = scmp.eq.s32.totalorder %s24, 0
      %p163 = por %p161, %p162
      %s164 = ssub.s32 %s25, %s37
      %s165 = ssub.s32 %s26, %s33
      %s166 = sor.u32 %s164, %s165
      %p167 = scmp.eq.s32.totalorder %s166, 0
      %s169 = sadd.s32 %s168, 1
      %s170 = scalar_select %p167, %s168, %s169
      %p173 = pneg %p167
      %p174 = scmp.eq.s32.totalorder %s18, 3
      %p175 = por %p173, %p174
      %p176 = scmp.ne.s32.totalorder %s168, %s171
      %p177 = scmp.eq.s32.totalorder %s18, 0
      %p178 = por %p176, %p177
      %p179 = scmp.ne.s32.totalorder %s168, %s171
      %p180 = scmp.eq.s32.totalorder %s23, 3
      %p181 = por %p179, %p180
      %p182 = scmp.ne.s32.totalorder %s171, %s172
      %p183 = scmp.eq.s32.totalorder %s23, 0
      %p184 = por %p182, %p183
      %p185 = scmp.ne.s32.totalorder %s171, %s172
      %p186 = scmp.eq.s32.totalorder %s24, 3
      %p187 = por %p185, %p186
      %p189 = scmp.ne.s32.totalorder %s172, %s188
      %p190 = scmp.eq.s32.totalorder %s24, 0
      %p191 = por %p189, %p190
      %p192 = scmp.le.s32.totalorder 1, %s18
      %p193 = scmp.lt.s32.totalorder %s18, 5
      %p194 = pnand %p192, %p193
      %p195 = pneg %p194
      // Predicated region
      $region9: #{tpu_custom_call.1} parent=5 // pred_check
        _
      $region10: #{tpu_custom_call.1} parent=5 // pred_check_branch
        %197 = sbr.rel (%p194) target = $region12
      $region11: #{tpu_custom_call.1} parent=5 // pred_region
        %s198 = ssub.s32 %s18, 1
        // Predicated region
        $region13: #{tpu_custom_call.1} parent=11 // pred_check
          %p199 = pneg %p51
        $region14: #{tpu_custom_call.1} parent=11 // pred_check_branch
          %201 = sbr.rel (%p199) target = $region16
        $region15: #{tpu_custom_call.1} parent=11 // pred_region
          %s203 = ssub.s32 2048, 2048
          %204 = vsyncadd [#allocation6], %s203
          %s205 = sshll.u32 [#allocation5], 4
          %s206 = int_to_ptr.vmem [resolvable:$true] %s205
          %211 = dma.hbm_to_vmem [thread:$0]  %s1, 2048, %s206, [#allocation6], 128, 128, 8
        $region16: #{tpu_custom_call.1} parent=11 // pred_fallthru
          _
        // Predicated region
        $region17: #{tpu_custom_call.1} parent=11 // pred_check
          %p212 = pneg %p72
        $region18: #{tpu_custom_call.1} parent=11 // pred_check_branch
          %214 = sbr.rel (%p212) target = $region20
        $region19: #{tpu_custom_call.1} parent=11 // pred_region
          %s216 = ssub.s32 18432, 18432
          %217 = vsyncadd [#allocation9], %s216
          %s218 = sshll.u32 [#allocation8], 4
          %s219 = int_to_ptr.vmem [resolvable:$true] %s218
          %224 = dma.hbm_to_vmem [thread:$0]  %s2, 18432, %s219, [#allocation9], 128, 128, 8
        $region20: #{tpu_custom_call.1} parent=11 // pred_fallthru
          _
        // Predicated region
        $region21: #{tpu_custom_call.1} parent=11 // pred_check
          %p225 = pneg %p93
        $region22: #{tpu_custom_call.1} parent=11 // pred_check_branch
          %227 = sbr.rel (%p225) target = $region24
        $region23: #{tpu_custom_call.1} parent=11 // pred_region
          %s229 = ssub.s32 2048, 2048
          %230 = vsyncadd [#allocation9], %s229
          %s231 = sshll.u32 [#allocation10], 4
          %s232 = int_to_ptr.vmem [resolvable:$true] %s231
          %237 = dma.hbm_to_vmem [thread:$0]  %s3, 2048, %s232, [#allocation9], 128, 128, 8
        $region24: #{tpu_custom_call.1} parent=11 // pred_fallthru
          _
        // Predicated region
        $region25: #{tpu_custom_call.1} parent=11 // pred_check
          %p238 = pneg %p114
        $region26: #{tpu_custom_call.1} parent=11 // pred_check_branch
          %240 = sbr.rel (%p238) target = $region28
        $region27: #{tpu_custom_call.1} parent=11 // pred_region
          _
        $region28: #{tpu_custom_call.1} parent=11 // pred_fallthru
          _
        // Predicated region
        $region29: #{tpu_custom_call.1} parent=11 // pred_check
          %p241 = pneg %p135
        $region30: #{tpu_custom_call.1} parent=11 // pred_check_branch
          %243 = sbr.rel (%p241) target = $region32
        $region31: #{tpu_custom_call.1} parent=11 // pred_region
          _
        $region32: #{tpu_custom_call.1} parent=11 // pred_fallthru
          _
        // Predicated region
        $region33: #{tpu_custom_call.1} parent=11 // pred_check
          %p244 = pneg %p156
        $region34: #{tpu_custom_call.1} parent=11 // pred_check_branch
          %246 = sbr.rel (%p244) target = $region36
        $region35: #{tpu_custom_call.1} parent=11 // pred_region
          _
        $region36: #{tpu_custom_call.1} parent=11 // pred_fallthru
          _
      $region12: #{tpu_custom_call.1} parent=5 // pred_fallthru
        _
      %p247 = scmp.lt.s32.totalorder %s18, 4
      // Predicated region
      $region37: #{tpu_custom_call.1} parent=5 // pred_check
        %p248 = pneg %p247
      $region38: #{tpu_custom_call.1} parent=5 // pred_check_branch
        %250 = sbr.rel (%p248) target = $region40
      $region39: #{tpu_custom_call.1} parent=5 // pred_region
        _
      $region40: #{tpu_custom_call.1} parent=5 // pred_fallthru
        _
      %p251 = scmp.le.s32.totalorder 1, %s18
      %p252 = scmp.lt.s32.totalorder %s18, 5
      %p253 = pnand %p251, %p252
      %p254 = pneg %p253
      // Predicated region
      $region41: #{tpu_custom_call.1} parent=5 // pred_check
        _
      $region42: #{tpu_custom_call.1} parent=5 // pred_check_branch
        %256 = sbr.rel (%p253) target = $region44
      $region43: #{tpu_custom_call.1} parent=5 // pred_region
        %s257 = ssub.s32 %s18, 1
        // Predicated region
        $region45: #{tpu_custom_call.1} parent=43 // pred_check
          %p258 = pneg %p51
        $region46: #{tpu_custom_call.1} parent=43 // pred_check_branch
          %260 = sbr.rel (%p258) target = $region48
        $region47: #{tpu_custom_call.1} parent=43 // pred_region
          %261 = dma.done [#allocation6], 2048
        $region48: #{tpu_custom_call.1} parent=43 // pred_fallthru
          _
        // Predicated region
        $region49: #{tpu_custom_call.1} parent=43 // pred_check
          %p262 = pneg %p72
        $region50: #{tpu_custom_call.1} parent=43 // pred_check_branch
          %264 = sbr.rel (%p262) target = $region52
        $region51: #{tpu_custom_call.1} parent=43 // pred_region
          %265 = dma.done [#allocation9], 18432
        $region52: #{tpu_custom_call.1} parent=43 // pred_fallthru
          _
        // Predicated region
        $region53: #{tpu_custom_call.1} parent=43 // pred_check
          %p266 = pneg %p93
        $region54: #{tpu_custom_call.1} parent=43 // pred_check_branch
          %268 = sbr.rel (%p266) target = $region56
        $region55: #{tpu_custom_call.1} parent=43 // pred_region
          %269 = dma.done [#allocation9], 2048
        $region56: #{tpu_custom_call.1} parent=43 // pred_fallthru
          _
        %p270 = pneg %p51
        %p271 = pneg %p48
        %p272 = pneg %p72
        %p273 = pneg %p69
        %p274 = pneg %p93
        %p275 = pneg %p90
        %p276 = pneg %p114
        %p277 = pneg %p111
        %p278 = pneg %p135
        %p279 = pneg %p132
        %p280 = pneg %p156
        %p281 = pneg %p153
        %p282 = pneg %p184
        %p283 = pneg %p181
        %s284 = sand.u32 %s171, 1
        %s285 = scalar_lea.sflag [#allocation7], %s284
        %s286 = sand.u32 %s171, 1
        %s287 = smul.addr %s286, 128
        %s288 = scalar_lea.vmem [#allocation11], %s287
        %s289 = smul.u32 8, %s28
        %s290 = smul.u32 %s28, 8
        %s291 = smul.u32 %s290, 16
        %s292 = smul.u32 %s27, 288
        %s293 = sadd.s32 %s291, %s292
        %s294 = smul.addr %s293, 16
        %s295 = scalar_lea.hbm %s0, %s294
        // Predicated region
        $region57: #{tpu_custom_call.1} parent=43 // pred_check
          _
        $region58: #{tpu_custom_call.1} parent=43 // pred_check_branch
          %297 = sbr.rel target = $region60
        $region59: #{tpu_custom_call.1} parent=43 // pred_region
          %298 = sst [smem:[#allocation14]] [#allocation13]
          %299 = sst [smem:[#allocation15]] [#allocation12]
        $region60: #{tpu_custom_call.1} parent=43 // pred_fallthru
          _
        %301 = shalt.err (0)
        %s303 = sshll.u32 [#allocation2], 4
        %s304 = int_to_ptr.vmem [resolvable:$true] %s303
        %306 = dma.hbm_to_vmem [thread:$0]  %s295, 2560, %s304, [#allocation4]
        %s307 = smul.u32 10, 16
        %s308 = smul.u32 %s307, 1
        %s309 = sshll.u32 %s308, 4
        %310 = dma.done [#allocation4], %s309
        %v311 = vld [vmem:[#allocation2] sm:$0xff]
        %v312 = vld [vmem:[#allocation2 + $0x8] sm:$0xff]
        %v313 = vld [vmem:[#allocation2 + $0x10] sm:$0xff]
        %v314 = vld [vmem:[#allocation2 + $0x18] sm:$0xff]
        %v315 = vld [vmem:[#allocation2 + $0x20] sm:$0xff]
        %v316 = vld [vmem:[#allocation2 + $0x28] sm:$0xff]
        %v317 = vld [vmem:[#allocation2 + $0x30] sm:$0xff]
        %v318 = vld [vmem:[#allocation2 + $0x38] sm:$0xff]
        %v319 = vld [vmem:[#allocation2 + $0x40] sm:$0xff]
        %v320 = vld [vmem:[#allocation2 + $0x48] sm:$0xff]
        %v321 = vld [vmem:[#allocation2 + $0x50] sm:$0xff]
        %v322 = vld [vmem:[#allocation2 + $0x58] sm:$0xff]
        %v323 = vld [vmem:[#allocation2 + $0x60] sm:$0xff]
        %v324 = vld [vmem:[#allocation2 + $0x68] sm:$0xff]
        %v325 = vld [vmem:[#allocation2 + $0x70] sm:$0xff]
        %v326 = vld [vmem:[#allocation2 + $0x78] sm:$0xff]
        %v327 = vld [vmem:[#allocation2 + $0x80] sm:$0xff]
        %v328 = vld [vmem:[#allocation2 + $0x88] sm:$0xff]
        %v329 = vld [vmem:[#allocation2 + $0x90] sm:$0xff]
        %v330 = vld [vmem:[#allocation2 + $0x98] sm:$0xff]
        %v331 = vld [vmem:[#allocation5] sm:$0xff]
        %v332 = vld [vmem:[#allocation5 + $0x8] sm:$0xff]
        %v333 = vld [vmem:[#allocation5 + $0x10] sm:$0xff]
        %v334 = vld [vmem:[#allocation5 + $0x18] sm:$0xff]
        %v335 = vld [vmem:[#allocation5 + $0x20] sm:$0xff]
        %v336 = vld [vmem:[#allocation5 + $0x28] sm:$0xff]
        %v337 = vld [vmem:[#allocation5 + $0x30] sm:$0xff]
        %v338 = vld [vmem:[#allocation5 + $0x38] sm:$0xff]
        %v339 = vld [vmem:[#allocation5 + $0x40] sm:$0xff]
        %v340 = vld [vmem:[#allocation5 + $0x48] sm:$0xff]
        %v341 = vld [vmem:[#allocation5 + $0x50] sm:$0xff]
        %v342 = vld [vmem:[#allocation5 + $0x58] sm:$0xff]
        %v343 = vld [vmem:[#allocation5 + $0x60] sm:$0xff]
        %v344 = vld [vmem:[#allocation5 + $0x68] sm:$0xff]
        %v345 = vld [vmem:[#allocation5 + $0x70] sm:$0xff]
        %v346 = vld [vmem:[#allocation5 + $0x78] sm:$0xff]
        %v347 = vld [vmem:[%s4] sm:$0x1]
        %v349 = vlaneseq
        %v350 = vshrl.u32 %v349, 7
        %v351 = vsub.s32 0, %v350
        %v352 = vrot.slane %v347, %v351
        %354 = vmatprep.subr.mxu0 0.0
        %355 = vmatpush1.msra.mxu0 %v346
        %356 = vmatprep.subr.mxu0 0.0
        %357 = vmatpush1.msra.mxu0 %v345
        %358 = vmatprep.subr.mxu0 0.0
        %359 = vmatpush1.msra.mxu0 %v344
        %360 = vmatprep.subr.mxu0 0.0
        %361 = vmatpush1.msra.mxu0 %v343
        %362 = vmatprep.subr.mxu0 0.0
        %363 = vmatpush1.msra.mxu0 %v342
        %364 = vmatprep.subr.mxu0 0.0
        %365 = vmatpush1.msra.mxu0 %v341
        %366 = vmatprep.subr.mxu0 0.0
        %367 = vmatpush1.msra.mxu0 %v340
        %368 = vmatprep.subr.mxu0 0.0
        %369 = vmatpush1.msra.mxu0 %v339
        %370 = vmatprep.subr.mxu0 0.0
        %371 = vmatpush1.msra.mxu0 %v338
        %372 = vmatprep.subr.mxu0 0.0
        %373 = vmatpush1.msra.mxu0 %v337
        %374 = vmatprep.subr.mxu0 0.0
        %375 = vmatpush1.msra.mxu0 %v336
        %376 = vmatprep.subr.mxu0 0.0
        %377 = vmatpush1.msra.mxu0 %v335
        %378 = vmatprep.subr.mxu0 0.0
        %379 = vmatpush1.msra.mxu0 %v334
        %380 = vmatprep.subr.mxu0 0.0
        %381 = vmatpush1.msra.mxu0 %v333
        %382 = vmatprep.subr.mxu0 0.0
        %383 = vmatpush1.msra.mxu0 %v332
        %384 = vmatprep.subr.mxu0 0.0
        %385 = vmatpush1.msra.mxu0 %v331
        %386 = vmatprep.subr.mxu0 0.0
        %387 = vmatpush2.msra.mxu0 0.0
        %388 = vmatprep.subr.mxu0 0.0
        %389 = vmatpush2.msra.mxu0 0.0
        %390 = vmatprep.subr.mxu0 0.0
        %391 = vmatpush2.msra.mxu0 0.0
        %392 = vmatprep.subr.mxu0 0.0
        %393 = vmatpush2.msra.mxu0 0.0
        %394 = vmatprep.subr.mxu0 0.0
        %395 = vmatpush2.msra.mxu0 0.0
        %396 = vmatprep.subr.mxu0 0.0
        %397 = vmatpush2.msra.mxu0 0.0
        %398 = vmatprep.subr.mxu0 0.0
        %399 = vmatpush2.msra.mxu0 0.0
        %400 = vmatprep.subr.mxu0 0.0
        %401 = vmatpush2.msra.mxu0 0.0
        %402 = vmatprep.subr.mxu0 0.0
        %403 = vmatpush2.msra.mxu0 0.0
        %404 = vmatprep.subr.mxu0 0.0
        %405 = vmatpush2.msra.mxu0 0.0
        %406 = vmatprep.subr.mxu0 0.0
        %407 = vmatpush2.msra.mxu0 0.0
        %408 = vmatprep.subr.mxu0 0.0
        %409 = vmatpush2.msra.mxu0 0.0
        %410 = vmatprep.subr.mxu0 0.0
        %411 = vmatpush2.msra.mxu0 0.0
        %412 = vmatprep.subr.mxu0 0.0
        %413 = vmatpush2.msra.mxu0 0.0
        %414 = vmatprep.subr.mxu0 0.0
        %415 = vmatpush2.msra.mxu0 0.0
        %416 = vmatprep.subr.mxu0 0.0
        %417 = vmatpush2.msra.mxu0 0.0
        %418 = vmatprep.mubr.f32.mxu0 0.0
        %419 = vmatmul.mubr.f32.gmra.mxu0 %v311
        %v420 = vpop.f32.mrf.mxu0
        %v421 = vadd.f32 %v352, %v420
        %v422 = vpop.f32.mrf.mxu0
        %423 = vmatprep.mubr.f32.mxu0 0.0
        %424 = vmatmul.mubr.f32.gmra.mxu0 %v312
        %v425 = vpop.f32.mrf.mxu0
        %v426 = vadd.f32 %v352, %v425
        %v427 = vpop.f32.mrf.mxu0
        %428 = vmatprep.mubr.f32.mxu0 0.0
        %429 = vmatmul.mubr.f32.gmra.mxu0 %v313
        %v430 = vpop.f32.mrf.mxu0
        %v431 = vadd.f32 %v352, %v430
        %v432 = vpop.f32.mrf.mxu0
        %433 = vmatprep.mubr.f32.mxu0 0.0
        %434 = vmatmul.mubr.f32.gmra.mxu0 %v314
        %v435 = vpop.f32.mrf.mxu0
        %v436 = vadd.f32 %v352, %v435
        %v437 = vpop.f32.mrf.mxu0
        %438 = vmatprep.mubr.f32.mxu0 0.0
        %439 = vmatmul.mubr.f32.gmra.mxu0 %v315
        %v440 = vpop.f32.mrf.mxu0
        %v441 = vadd.f32 %v352, %v440
        %v442 = vpop.f32.mrf.mxu0
        %443 = vmatprep.mubr.f32.mxu0 0.0
        %444 = vmatmul.mubr.f32.gmra.mxu0 %v316
        %v445 = vpop.f32.mrf.mxu0
        %v446 = vadd.f32 %v352, %v445
        %v447 = vpop.f32.mrf.mxu0
        %448 = vmatprep.mubr.f32.mxu0 0.0
        %449 = vmatmul.mubr.f32.gmra.mxu0 %v317
        %v450 = vpop.f32.mrf.mxu0
        %v451 = vadd.f32 %v352, %v450
        %v452 = vpop.f32.mrf.mxu0
        %453 = vmatprep.mubr.f32.mxu0 0.0
        %454 = vmatmul.mubr.f32.gmra.mxu0 %v318
        %v455 = vpop.f32.mrf.mxu0
        %v456 = vadd.f32 %v352, %v455
        %v457 = vpop.f32.mrf.mxu0
        %458 = vmatprep.mubr.f32.mxu0 0.0
        %459 = vmatmul.mubr.f32.gmra.mxu0 %v319
        %v460 = vpop.f32.mrf.mxu0
        %v461 = vadd.f32 %v352, %v460
        %v462 = vpop.f32.mrf.mxu0
        %463 = vmatprep.mubr.f32.mxu0 0.0
        %464 = vmatmul.mubr.f32.gmra.mxu0 %v320
        %v465 = vpop.f32.mrf.mxu0
        %v466 = vadd.f32 %v352, %v465
        %v467 = vpop.f32.mrf.mxu0
        %468 = vmatprep.mubr.f32.mxu0 0.0
        %469 = vmatmul.mubr.f32.gmra.mxu0 %v321
        %v470 = vpop.f32.mrf.mxu0
        %v471 = vadd.f32 %v352, %v470
        %v472 = vpop.f32.mrf.mxu0
        %473 = vmatprep.mubr.f32.mxu0 0.0
        %474 = vmatmul.mubr.f32.gmra.mxu0 %v322
        %v475 = vpop.f32.mrf.mxu0
        %v476 = vadd.f32 %v352, %v475
        %v477 = vpop.f32.mrf.mxu0
        %478 = vmatprep.mubr.f32.mxu0 0.0
        %479 = vmatmul.mubr.f32.gmra.mxu0 %v323
        %v480 = vpop.f32.mrf.mxu0
        %v481 = vadd.f32 %v352, %v480
        %v482 = vpop.f32.mrf.mxu0
        %483 = vmatprep.mubr.f32.mxu0 0.0
        %484 = vmatmul.mubr.f32.gmra.mxu0 %v324
        %v485 = vpop.f32.mrf.mxu0
        %v486 = vadd.f32 %v352, %v485
        %v487 = vpop.f32.mrf.mxu0
        %488 = vmatprep.mubr.f32.mxu0 0.0
        %489 = vmatmul.mubr.f32.gmra.mxu0 %v325
        %v490 = vpop.f32.mrf.mxu0
        %v491 = vadd.f32 %v352, %v490
        %v492 = vpop.f32.mrf.mxu0
        %493 = vmatprep.mubr.f32.mxu0 0.0
        %494 = vmatmul.mubr.f32.gmra.mxu0 %v326
        %v495 = vpop.f32.mrf.mxu0
        %v496 = vadd.f32 %v352, %v495
        %v497 = vpop.f32.mrf.mxu0
        %498 = vmatprep.mubr.f32.mxu0 0.0
        %499 = vmatmul.mubr.f32.gmra.mxu0 %v327
        %v500 = vpop.f32.mrf.mxu0
        %v501 = vadd.f32 %v352, %v500
        %v502 = vpop.f32.mrf.mxu0
        %503 = vmatprep.mubr.f32.mxu0 0.0
        %504 = vmatmul.mubr.f32.gmra.mxu0 %v328
        %v505 = vpop.f32.mrf.mxu0
        %v506 = vadd.f32 %v352, %v505
        %v507 = vpop.f32.mrf.mxu0
        %508 = vmatprep.mubr.f32.mxu0 0.0
        %509 = vmatmul.mubr.f32.gmra.mxu0 %v329
        %v510 = vpop.f32.mrf.mxu0
        %v511 = vadd.f32 %v352, %v510
        %v512 = vpop.f32.mrf.mxu0
        %513 = vmatprep.mubr.f32.mxu0 0.0
        %514 = vmatmul.mubr.f32.gmra.mxu0 %v330
        %v515 = vpop.f32.mrf.mxu0
        %v516 = vadd.f32 %v352, %v515
        %v517 = vpop.f32.mrf.mxu0
        %518 = vdwg.mxu0
        %v519 = vmax.f32 %v421, 0.0
        %v520 = vmax.f32 %v426, 0.0
        %v521 = vmax.f32 %v431, 0.0
        %v522 = vmax.f32 %v436, 0.0
        %v523 = vmax.f32 %v441, 0.0
        %v524 = vmax.f32 %v446, 0.0
        %v525 = vmax.f32 %v451, 0.0
        %v526 = vmax.f32 %v456, 0.0
        %v527 = vmax.f32 %v461, 0.0
        %v528 = vmax.f32 %v466, 0.0
        %v529 = vmax.f32 %v471, 0.0
        %v530 = vmax.f32 %v476, 0.0
        %v531 = vmax.f32 %v481, 0.0
        %v532 = vmax.f32 %v486, 0.0
        %v533 = vmax.f32 %v491, 0.0
        %v534 = vmax.f32 %v496, 0.0
        %v535 = vmax.f32 %v501, 0.0
        %v536 = vmax.f32 %v506, 0.0
        %v537 = vmax.f32 %v511, 0.0
        %v538 = vmax.f32 %v516, 0.0
        %v539 = vstv %s290
        %v540 = vadd.s32 %v539, 2
        %v541 = vadd.s32 %v539, 3
        %v542 = vadd.s32 %v539, 4
        %v543 = vadd.s32 %v539, 5
        %v544 = vadd.s32 %v539, 6
        %v545 = vadd.s32 %v539, 7
        %v546 = vadd.s32 %v539, 8
        %v547 = vadd.s32 %v539, 9
        %v548 = vsub.s32 %v539, 1
        %v549 = vsub.s32 %v540, 1
        %v550 = vsub.s32 %v541, 1
        %v551 = vsub.s32 %v542, 1
        %v552 = vsub.s32 %v543, 1
        %v553 = vsub.s32 %v544, 1
        %v554 = vsub.s32 %v545, 1
        %v555 = vsub.s32 %v546, 1
        %v556 = vsub.s32 %v547, 1
        %vm557 = vcmp.ge.s32.totalorder %v548, 0
        %vm558 = vcmp.ge.s32.totalorder %v539, 0
        %vm559 = vcmp.ge.s32.totalorder %v549, 0
        %vm560 = vcmp.ge.s32.totalorder %v550, 0
        %vm561 = vcmp.ge.s32.totalorder %v551, 0
        %vm562 = vcmp.ge.s32.totalorder %v552, 0
        %vm563 = vcmp.ge.s32.totalorder %v553, 0
        %vm564 = vcmp.ge.s32.totalorder %v554, 0
        %vm565 = vcmp.ge.s32.totalorder %v555, 0
        %vm566 = vcmp.ge.s32.totalorder %v556, 0
        %vm567 = vcmp.lt.s32.totalorder %v548, 16
        %vm568 = vcmp.lt.s32.totalorder %v539, 16
        %vm569 = vcmp.lt.s32.totalorder %v549, 16
        %vm570 = vcmp.lt.s32.totalorder %v550, 16
        %vm571 = vcmp.lt.s32.totalorder %v551, 16
        %vm572 = vcmp.lt.s32.totalorder %v552, 16
        %vm573 = vcmp.lt.s32.totalorder %v553, 16
        %vm574 = vcmp.lt.s32.totalorder %v554, 16
        %vm575 = vcmp.lt.s32.totalorder %v555, 16
        %vm576 = vcmp.lt.s32.totalorder %v556, 16
        %vm577 = vmand %vm557, %vm567
        %vm578 = vmand %vm558, %vm568
        %vm579 = vmand %vm559, %vm569
        %vm580 = vmand %vm560, %vm570
        %vm581 = vmand %vm561, %vm571
        %vm582 = vmand %vm562, %vm572
        %vm583 = vmand %vm563, %vm573
        %vm584 = vmand %vm564, %vm574
        %vm585 = vmand %vm565, %vm575
        %vm586 = vmand %vm566, %vm576
        %v587 = vsel %vm577, 1, 0
        %v588 = vsel %vm578, 1, 0
        %v589 = vsel %vm579, 1, 0
        %v590 = vsel %vm580, 1, 0
        %v591 = vsel %vm581, 1, 0
        %v592 = vsel %vm582, 1, 0
        %v593 = vsel %vm583, 1, 0
        %v594 = vsel %vm584, 1, 0
        %v595 = vsel %vm585, 1, 0
        %v596 = vsel %vm586, 1, 0
        %vm597 = vcmp.eq.s32.totalorder %v587, 1
        %vm598 = vcmp.eq.s32.totalorder %v588, 1
        %vm599 = vcmp.eq.s32.totalorder %v589, 1
        %vm600 = vcmp.eq.s32.totalorder %v590, 1
        %vm601 = vcmp.eq.s32.totalorder %v591, 1
        %vm602 = vcmp.eq.s32.totalorder %v592, 1
        %vm603 = vcmp.eq.s32.totalorder %v593, 1
        %vm604 = vcmp.eq.s32.totalorder %v594, 1
        %vm605 = vcmp.eq.s32.totalorder %v595, 1
        %vm606 = vcmp.eq.s32.totalorder %v596, 1
        %v607 = vsel %vm597, %v519, 0.0
        %v608 = vsel %vm597, %v520, 0.0
        %v609 = vsel %vm598, %v521, 0.0
        %v610 = vsel %vm598, %v522, 0.0
        %v611 = vsel %vm599, %v523, 0.0
        %v612 = vsel %vm599, %v524, 0.0
        %v613 = vsel %vm600, %v525, 0.0
        %v614 = vsel %vm600, %v526, 0.0
        %v615 = vsel %vm601, %v527, 0.0
        %v616 = vsel %vm601, %v528, 0.0
        %v617 = vsel %vm602, %v529, 0.0
        %v618 = vsel %vm602, %v530, 0.0
        %v619 = vsel %vm603, %v531, 0.0
        %v620 = vsel %vm603, %v532, 0.0
        %v621 = vsel %vm604, %v533, 0.0
        %v622 = vsel %vm604, %v534, 0.0
        %v623 = vsel %vm605, %v535, 0.0
        %v624 = vsel %vm605, %v536, 0.0
        %v625 = vsel %vm606, %v537, 0.0
        %v626 = vsel %vm606, %v538, 0.0
        %627 = vst [vmem:[#allocation3] sm:$0x1] 0.0
        %628 = vst [vmem:[#allocation3 + $0x18] sm:$0x1] 0.0
        %629 = vst [vmem:[#allocation3 + $0x30] sm:$0x1] 0.0
        %630 = vst [vmem:[#allocation3 + $0x48] sm:$0x1] 0.0
        %631 = vst [vmem:[#allocation3 + $0x60] sm:$0x1] 0.0
        %632 = vst [vmem:[#allocation3 + $0x78] sm:$0x1] 0.0
        %633 = vst [vmem:[#allocation3 + $0x90] sm:$0x1] 0.0
        %634 = vst [vmem:[#allocation3 + $0xa8] sm:$0x1] 0.0
        %635 = vst [vmem:[#allocation3 + $0xc0] sm:$0x1] 0.0
        %636 = vst [vmem:[#allocation3 + $0xd8] sm:$0x1] 0.0
        %637 = vst [vmem:[#allocation3 + $0x11] sm:$0x1] 0.0
        %638 = vst [vmem:[#allocation3 + $0x29] sm:$0x1] 0.0
        %639 = vst [vmem:[#allocation3 + $0x41] sm:$0x1] 0.0
        %640 = vst [vmem:[#allocation3 + $0x59] sm:$0x1] 0.0
        %641 = vst [vmem:[#allocation3 + $0x71] sm:$0x1] 0.0
        %642 = vst [vmem:[#allocation3 + $0x89] sm:$0x1] 0.0
        %643 = vst [vmem:[#allocation3 + $0xa1] sm:$0x1] 0.0
        %644 = vst [vmem:[#allocation3 + $0xb9] sm:$0x1] 0.0
        %645 = vst [vmem:[#allocation3 + $0xd1] sm:$0x1] 0.0
        %646 = vst [vmem:[#allocation3 + $0xe9] sm:$0x1] 0.0
        %647 = vst [vmem:[#allocation3 + $0x1] sm:$0xff] %v607
        %648 = vst [vmem:[#allocation3 + $0x9] sm:$0xff] %v608
        %649 = vst [vmem:[#allocation3 + $0x19] sm:$0xff] %v609
        %650 = vst [vmem:[#allocation3 + $0x21] sm:$0xff] %v610
        %651 = vst [vmem:[#allocation3 + $0x31] sm:$0xff] %v611
        %652 = vst [vmem:[#allocation3 + $0x39] sm:$0xff] %v612
        %653 = vst [vmem:[#allocation3 + $0x49] sm:$0xff] %v613
        %654 = vst [vmem:[#allocation3 + $0x51] sm:$0xff] %v614
        %655 = vst [vmem:[#allocation3 + $0x61] sm:$0xff] %v615
        %656 = vst [vmem:[#allocation3 + $0x69] sm:$0xff] %v616
        %657 = vst [vmem:[#allocation3 + $0x79] sm:$0xff] %v617
        %658 = vst [vmem:[#allocation3 + $0x81] sm:$0xff] %v618
        %659 = vst [vmem:[#allocation3 + $0x91] sm:$0xff] %v619
        %660 = vst [vmem:[#allocation3 + $0x99] sm:$0xff] %v620
        %661 = vst [vmem:[#allocation3 + $0xa9] sm:$0xff] %v621
        %662 = vst [vmem:[#allocation3 + $0xb1] sm:$0xff] %v622
        %663 = vst [vmem:[#allocation3 + $0xc1] sm:$0xff] %v623
        %664 = vst [vmem:[#allocation3 + $0xc9] sm:$0xff] %v624
        %665 = vst [vmem:[#allocation3 + $0xd9] sm:$0xff] %v625
        %666 = vst [vmem:[#allocation3 + $0xe1] sm:$0xff] %v626
        %v667 = vld [vmem:[#allocation3] sm:$0xff]
        %v668 = vld [vmem:[#allocation3 + $0x8] sm:$0xff]
        %v669 = vld [vmem:[#allocation3 + $0x18] sm:$0xff]
        %v670 = vld [vmem:[#allocation3 + $0x20] sm:$0xff]
        %v671 = vld [vmem:[#allocation3 + $0x30] sm:$0xff]
        %v672 = vld [vmem:[#allocation3 + $0x38] sm:$0xff]
        %v673 = vld [vmem:[#allocation3 + $0x48] sm:$0xff]
        %v674 = vld [vmem:[#allocation3 + $0x50] sm:$0xff]
        %v675 = vld [vmem:[#allocation3 + $0x60] sm:$0xff]
        %v676 = vld [vmem:[#allocation3 + $0x68] sm:$0xff]
        %v677 = vld [vmem:[#allocation3 + $0x78] sm:$0xff]
        %v678 = vld [vmem:[#allocation3 + $0x80] sm:$0xff]
        %v679 = vld [vmem:[#allocation3 + $0x90] sm:$0xff]
        %v680 = vld [vmem:[#allocation3 + $0x98] sm:$0xff]
        %v681 = vld [vmem:[#allocation3 + $0xa8] sm:$0xff]
        %v682 = vld [vmem:[#allocation3 + $0xb0] sm:$0xff]
        %v683 = vld [vmem:[#allocation3 + $0x1] sm:$0xff]
        %v684 = vld [vmem:[#allocation3 + $0x9] sm:$0xff]
        %v685 = vld [vmem:[#allocation3 + $0x19] sm:$0xff]
        %v686 = vld [vmem:[#allocation3 + $0x21] sm:$0xff]
        %v687 = vld [vmem:[#allocation3 + $0x31] sm:$0xff]
        %v688 = vld [vmem:[#allocation3 + $0x39] sm:$0xff]
        %v689 = vld [vmem:[#allocation3 + $0x49] sm:$0xff]
        %v690 = vld [vmem:[#allocation3 + $0x51] sm:$0xff]
        %v691 = vld [vmem:[#allocation3 + $0x61] sm:$0xff]
        %v692 = vld [vmem:[#allocation3 + $0x69] sm:$0xff]
        %v693 = vld [vmem:[#allocation3 + $0x79] sm:$0xff]
        %v694 = vld [vmem:[#allocation3 + $0x81] sm:$0xff]
        %v695 = vld [vmem:[#allocation3 + $0x91] sm:$0xff]
        %v696 = vld [vmem:[#allocation3 + $0x99] sm:$0xff]
        %v697 = vld [vmem:[#allocation3 + $0xa9] sm:$0xff]
        %v698 = vld [vmem:[#allocation3 + $0xb1] sm:$0xff]
        %v699 = vld [vmem:[#allocation3 + $0x2] sm:$0xff]
        %v700 = vld [vmem:[#allocation3 + $0xa] sm:$0xff]
        %v701 = vld [vmem:[#allocation3 + $0x1a] sm:$0xff]
        %v702 = vld [vmem:[#allocation3 + $0x22] sm:$0xff]
        %v703 = vld [vmem:[#allocation3 + $0x32] sm:$0xff]
        %v704 = vld [vmem:[#allocation3 + $0x3a] sm:$0xff]
        %v705 = vld [vmem:[#allocation3 + $0x4a] sm:$0xff]
        %v706 = vld [vmem:[#allocation3 + $0x52] sm:$0xff]
        %v707 = vld [vmem:[#allocation3 + $0x62] sm:$0xff]
        %v708 = vld [vmem:[#allocation3 + $0x6a] sm:$0xff]
        %v709 = vld [vmem:[#allocation3 + $0x7a] sm:$0xff]
        %v710 = vld [vmem:[#allocation3 + $0x82] sm:$0xff]
        %v711 = vld [vmem:[#allocation3 + $0x92] sm:$0xff]
        %v712 = vld [vmem:[#allocation3 + $0x9a] sm:$0xff]
        %v713 = vld [vmem:[#allocation3 + $0xaa] sm:$0xff]
        %v714 = vld [vmem:[#allocation3 + $0xb2] sm:$0xff]
        %s715 = scalar_lea.vmem [#allocation3], 24
        %v716 = vld [vmem:[%s715] sm:$0xff]
        %v717 = vld [vmem:[%s715 + $0x8] sm:$0xff]
        %v718 = vld [vmem:[%s715 + $0x18] sm:$0xff]
        %v719 = vld [vmem:[%s715 + $0x20] sm:$0xff]
        %v720 = vld [vmem:[%s715 + $0x30] sm:$0xff]
        %v721 = vld [vmem:[%s715 + $0x38] sm:$0xff]
        %v722 = vld [vmem:[%s715 + $0x48] sm:$0xff]
        %v723 = vld [vmem:[%s715 + $0x50] sm:$0xff]
        %v724 = vld [vmem:[%s715 + $0x60] sm:$0xff]
        %v725 = vld [vmem:[%s715 + $0x68] sm:$0xff]
        %v726 = vld [vmem:[%s715 + $0x78] sm:$0xff]
        %v727 = vld [vmem:[%s715 + $0x80] sm:$0xff]
        %v728 = vld [vmem:[%s715 + $0x90] sm:$0xff]
        %v729 = vld [vmem:[%s715 + $0x98] sm:$0xff]
        %v730 = vld [vmem:[%s715 + $0xa8] sm:$0xff]
        %v731 = vld [vmem:[%s715 + $0xb0] sm:$0xff]
        %v732 = vld [vmem:[%s715 + $0x1] sm:$0xff]
        %v733 = vld [vmem:[%s715 + $0x9] sm:$0xff]
        %v734 = vld [vmem:[%s715 + $0x19] sm:$0xff]
        %v735 = vld [vmem:[%s715 + $0x21] sm:$0xff]
        %v736 = vld [vmem:[%s715 + $0x31] sm:$0xff]
        %v737 = vld [vmem:[%s715 + $0x39] sm:$0xff]
        %v738 = vld [vmem:[%s715 + $0x49] sm:$0xff]
        %v739 = vld [vmem:[%s715 + $0x51] sm:$0xff]
        %v740 = vld [vmem:[%s715 + $0x61] sm:$0xff]
        %v741 = vld [vmem:[%s715 + $0x69] sm:$0xff]
        %v742 = vld [vmem:[%s715 + $0x79] sm:$0xff]
        %v743 = vld [vmem:[%s715 + $0x81] sm:$0xff]
        %v744 = vld [vmem:[%s715 + $0x91] sm:$0xff]
        %v745 = vld [vmem:[%s715 + $0x99] sm:$0xff]
        %v746 = vld [vmem:[%s715 + $0xa9] sm:$0xff]
        %v747 = vld [vmem:[%s715 + $0xb1] sm:$0xff]
        %v748 = vld [vmem:[%s715 + $0x2] sm:$0xff]
        %v749 = vld [vmem:[%s715 + $0xa] sm:$0xff]
        %v750 = vld [vmem:[%s715 + $0x1a] sm:$0xff]
        %v751 = vld [vmem:[%s715 + $0x22] sm:$0xff]
        %v752 = vld [vmem:[%s715 + $0x32] sm:$0xff]
        %v753 = vld [vmem:[%s715 + $0x3a] sm:$0xff]
        %v754 = vld [vmem:[%s715 + $0x4a] sm:$0xff]
        %v755 = vld [vmem:[%s715 + $0x52] sm:$0xff]
        %v756 = vld [vmem:[%s715 + $0x62] sm:$0xff]
        %v757 = vld [vmem:[%s715 + $0x6a] sm:$0xff]
        %v758 = vld [vmem:[%s715 + $0x7a] sm:$0xff]
        %v759 = vld [vmem:[%s715 + $0x82] sm:$0xff]
        %v760 = vld [vmem:[%s715 + $0x92] sm:$0xff]
        %v761 = vld [vmem:[%s715 + $0x9a] sm:$0xff]
        %v762 = vld [vmem:[%s715 + $0xaa] sm:$0xff]
        %v763 = vld [vmem:[%s715 + $0xb2] sm:$0xff]
        %s764 = scalar_lea.vmem [#allocation3], 48
        %v765 = vld [vmem:[%s764] sm:$0xff]
        %v766 = vld [vmem:[%s764 + $0x8] sm:$0xff]
        %v767 = vld [vmem:[%s764 + $0x18] sm:$0xff]
        %v768 = vld [vmem:[%s764 + $0x20] sm:$0xff]
        %v769 = vld [vmem:[%s764 + $0x30] sm:$0xff]
        %v770 = vld [vmem:[%s764 + $0x38] sm:$0xff]
        %v771 = vld [vmem:[%s764 + $0x48] sm:$0xff]
        %v772 = vld [vmem:[%s764 + $0x50] sm:$0xff]
        %v773 = vld [vmem:[%s764 + $0x60] sm:$0xff]
        %v774 = vld [vmem:[%s764 + $0x68] sm:$0xff]
        %v775 = vld [vmem:[%s764 + $0x78] sm:$0xff]
        %v776 = vld [vmem:[%s764 + $0x80] sm:$0xff]
        %v777 = vld [vmem:[%s764 + $0x90] sm:$0xff]
        %v778 = vld [vmem:[%s764 + $0x98] sm:$0xff]
        %v779 = vld [vmem:[%s764 + $0xa8] sm:$0xff]
        %v780 = vld [vmem:[%s764 + $0xb0] sm:$0xff]
        %v781 = vld [vmem:[%s764 + $0x1] sm:$0xff]
        %v782 = vld [vmem:[%s764 + $0x9] sm:$0xff]
        %v783 = vld [vmem:[%s764 + $0x19] sm:$0xff]
        %v784 = vld [vmem:[%s764 + $0x21] sm:$0xff]
        %v785 = vld [vmem:[%s764 + $0x31] sm:$0xff]
        %v786 = vld [vmem:[%s764 + $0x39] sm:$0xff]
        %v787 = vld [vmem:[%s764 + $0x49] sm:$0xff]
        %v788 = vld [vmem:[%s764 + $0x51] sm:$0xff]
        %v789 = vld [vmem:[%s764 + $0x61] sm:$0xff]
        %v790 = vld [vmem:[%s764 + $0x69] sm:$0xff]
        %v791 = vld [vmem:[%s764 + $0x79] sm:$0xff]
        %v792 = vld [vmem:[%s764 + $0x81] sm:$0xff]
        %v793 = vld [vmem:[%s764 + $0x91] sm:$0xff]
        %v794 = vld [vmem:[%s764 + $0x99] sm:$0xff]
        %v795 = vld [vmem:[%s764 + $0xa9] sm:$0xff]
        %v796 = vld [vmem:[%s764 + $0xb1] sm:$0xff]
        %v797 = vld [vmem:[%s764 + $0x2] sm:$0xff]
        %v798 = vld [vmem:[%s764 + $0xa] sm:$0xff]
        %v799 = vld [vmem:[%s764 + $0x1a] sm:$0xff]
        %v800 = vld [vmem:[%s764 + $0x22] sm:$0xff]
        %v801 = vld [vmem:[%s764 + $0x32] sm:$0xff]
        %v802 = vld [vmem:[%s764 + $0x3a] sm:$0xff]
        %v803 = vld [vmem:[%s764 + $0x4a] sm:$0xff]
        %v804 = vld [vmem:[%s764 + $0x52] sm:$0xff]
        %v805 = vld [vmem:[%s764 + $0x62] sm:$0xff]
        %v806 = vld [vmem:[%s764 + $0x6a] sm:$0xff]
        %v807 = vld [vmem:[%s764 + $0x7a] sm:$0xff]
        %v808 = vld [vmem:[%s764 + $0x82] sm:$0xff]
        %v809 = vld [vmem:[%s764 + $0x92] sm:$0xff]
        %v810 = vld [vmem:[%s764 + $0x9a] sm:$0xff]
        %v811 = vld [vmem:[%s764 + $0xaa] sm:$0xff]
        %v812 = vld [vmem:[%s764 + $0xb2] sm:$0xff]
        %v813 = vld [vmem:[#allocation8] sm:$0xff]
        %v814 = vld [vmem:[#allocation8 + $0x8] sm:$0xff]
        %v815 = vld [vmem:[#allocation8 + $0x10] sm:$0xff]
        %v816 = vld [vmem:[#allocation8 + $0x18] sm:$0xff]
        %v817 = vld [vmem:[#allocation8 + $0x20] sm:$0xff]
        %v818 = vld [vmem:[#allocation8 + $0x28] sm:$0xff]
        %v819 = vld [vmem:[#allocation8 + $0x30] sm:$0xff]
        %v820 = vld [vmem:[#allocation8 + $0x38] sm:$0xff]
        %v821 = vld [vmem:[#allocation8 + $0x40] sm:$0xff]
        %v822 = vld [vmem:[#allocation8 + $0x48] sm:$0xff]
        %v823 = vld [vmem:[#allocation8 + $0x50] sm:$0xff]
        %v824 = vld [vmem:[#allocation8 + $0x58] sm:$0xff]
        %v825 = vld [vmem:[#allocation8 + $0x60] sm:$0xff]
        %v826 = vld [vmem:[#allocation8 + $0x68] sm:$0xff]
        %v827 = vld [vmem:[#allocation8 + $0x70] sm:$0xff]
        %v828 = vld [vmem:[#allocation8 + $0x78] sm:$0xff]
        %v829 = vld [vmem:[#allocation8 + $0x80] sm:$0xff]
        %v830 = vld [vmem:[#allocation8 + $0x88] sm:$0xff]
        %v831 = vld [vmem:[#allocation8 + $0x90] sm:$0xff]
        %v832 = vld [vmem:[#allocation8 + $0x98] sm:$0xff]
        %v833 = vld [vmem:[#allocation8 + $0xa0] sm:$0xff]
        %v834 = vld [vmem:[#allocation8 + $0xa8] sm:$0xff]
        %v835 = vld [vmem:[#allocation8 + $0xb0] sm:$0xff]
        %v836 = vld [vmem:[#allocation8 + $0xb8] sm:$0xff]
        %v837 = vld [vmem:[#allocation8 + $0xc0] sm:$0xff]
        %v838 = vld [vmem:[#allocation8 + $0xc8] sm:$0xff]
        %v839 = vld [vmem:[#allocation8 + $0xd0] sm:$0xff]
        %v840 = vld [vmem:[#allocation8 + $0xd8] sm:$0xff]
        %v841 = vld [vmem:[#allocation8 + $0xe0] sm:$0xff]
        %v842 = vld [vmem:[#allocation8 + $0xe8] sm:$0xff]
        %v843 = vld [vmem:[#allocation8 + $0xf0] sm:$0xff]
        %v844 = vld [vmem:[#allocation8 + $0xf8] sm:$0xff]
        %v845 = vld [vmem:[#allocation8 + $0x100] sm:$0xff]
        %v846 = vld [vmem:[#allocation8 + $0x108] sm:$0xff]
        %v847 = vld [vmem:[#allocation8 + $0x110] sm:$0xff]
        %v848 = vld [vmem:[#allocation8 + $0x118] sm:$0xff]
        %v849 = vld [vmem:[#allocation8 + $0x120] sm:$0xff]
        %v850 = vld [vmem:[#allocation8 + $0x128] sm:$0xff]
        %v851 = vld [vmem:[#allocation8 + $0x130] sm:$0xff]
        %v852 = vld [vmem:[#allocation8 + $0x138] sm:$0xff]
        %v853 = vld [vmem:[#allocation8 + $0x140] sm:$0xff]
        %v854 = vld [vmem:[#allocation8 + $0x148] sm:$0xff]
        %v855 = vld [vmem:[#allocation8 + $0x150] sm:$0xff]
        %v856 = vld [vmem:[#allocation8 + $0x158] sm:$0xff]
        %v857 = vld [vmem:[#allocation8 + $0x160] sm:$0xff]
        %v858 = vld [vmem:[#allocation8 + $0x168] sm:$0xff]
        %v859 = vld [vmem:[#allocation8 + $0x170] sm:$0xff]
        %v860 = vld [vmem:[#allocation8 + $0x178] sm:$0xff]
        %v861 = vld [vmem:[#allocation8 + $0x180] sm:$0xff]
        %v862 = vld [vmem:[#allocation8 + $0x188] sm:$0xff]
        %v863 = vld [vmem:[#allocation8 + $0x190] sm:$0xff]
        %v864 = vld [vmem:[#allocation8 + $0x198] sm:$0xff]
        %v865 = vld [vmem:[#allocation8 + $0x1a0] sm:$0xff]
        %v866 = vld [vmem:[#allocation8 + $0x1a8] sm:$0xff]
        %v867 = vld [vmem:[#allocation8 + $0x1b0] sm:$0xff]
        %v868 = vld [vmem:[#allocation8 + $0x1b8] sm:$0xff]
        %v869 = vld [vmem:[#allocation8 + $0x1c0] sm:$0xff]
        %v870 = vld [vmem:[#allocation8 + $0x1c8] sm:$0xff]
        %v871 = vld [vmem:[#allocation8 + $0x1d0] sm:$0xff]
        %v872 = vld [vmem:[#allocation8 + $0x1d8] sm:$0xff]
        %v873 = vld [vmem:[#allocation8 + $0x1e0] sm:$0xff]
        %v874 = vld [vmem:[#allocation8 + $0x1e8] sm:$0xff]
        %v875 = vld [vmem:[#allocation8 + $0x1f0] sm:$0xff]
        %v876 = vld [vmem:[#allocation8 + $0x1f8] sm:$0xff]
        %v877 = vld [vmem:[#allocation8 + $0x200] sm:$0xff]
        %v878 = vld [vmem:[#allocation8 + $0x208] sm:$0xff]
        %v879 = vld [vmem:[#allocation8 + $0x210] sm:$0xff]
        %v880 = vld [vmem:[#allocation8 + $0x218] sm:$0xff]
        %v881 = vld [vmem:[#allocation8 + $0x220] sm:$0xff]
        %v882 = vld [vmem:[#allocation8 + $0x228] sm:$0xff]
        %v883 = vld [vmem:[#allocation8 + $0x230] sm:$0xff]
        %v884 = vld [vmem:[#allocation8 + $0x238] sm:$0xff]
        %v885 = vld [vmem:[#allocation8 + $0x240] sm:$0xff]
        %v886 = vld [vmem:[#allocation8 + $0x248] sm:$0xff]
        %v887 = vld [vmem:[#allocation8 + $0x250] sm:$0xff]
        %v888 = vld [vmem:[#allocation8 + $0x258] sm:$0xff]
        %v889 = vld [vmem:[#allocation8 + $0x260] sm:$0xff]
        %v890 = vld [vmem:[#allocation8 + $0x268] sm:$0xff]
        %v891 = vld [vmem:[#allocation8 + $0x270] sm:$0xff]
        %v892 = vld [vmem:[#allocation8 + $0x278] sm:$0xff]
        %v893 = vld [vmem:[#allocation8 + $0x280] sm:$0xff]
        %v894 = vld [vmem:[#allocation8 + $0x288] sm:$0xff]
        %v895 = vld [vmem:[#allocation8 + $0x290] sm:$0xff]
        %v896 = vld [vmem:[#allocation8 + $0x298] sm:$0xff]
        %v897 = vld [vmem:[#allocation8 + $0x2a0] sm:$0xff]
        %v898 = vld [vmem:[#allocation8 + $0x2a8] sm:$0xff]
        %v899 = vld [vmem:[#allocation8 + $0x2b0] sm:$0xff]
        %v900 = vld [vmem:[#allocation8 + $0x2b8] sm:$0xff]
        %v901 = vld [vmem:[#allocation8 + $0x2c0] sm:$0xff]
        %v902 = vld [vmem:[#allocation8 + $0x2c8] sm:$0xff]
        %v903 = vld [vmem:[#allocation8 + $0x2d0] sm:$0xff]
        %v904 = vld [vmem:[#allocation8 + $0x2d8] sm:$0xff]
        %v905 = vld [vmem:[#allocation8 + $0x2e0] sm:$0xff]
        %v906 = vld [vmem:[#allocation8 + $0x2e8] sm:$0xff]
        %v907 = vld [vmem:[#allocation8 + $0x2f0] sm:$0xff]
        %v908 = vld [vmem:[#allocation8 + $0x2f8] sm:$0xff]
        %v909 = vld [vmem:[#allocation8 + $0x300] sm:$0xff]
        %v910 = vld [vmem:[#allocation8 + $0x308] sm:$0xff]
        %v911 = vld [vmem:[#allocation8 + $0x310] sm:$0xff]
        %v912 = vld [vmem:[#allocation8 + $0x318] sm:$0xff]
        %v913 = vld [vmem:[#allocation8 + $0x320] sm:$0xff]
        %v914 = vld [vmem:[#allocation8 + $0x328] sm:$0xff]
        %v915 = vld [vmem:[#allocation8 + $0x330] sm:$0xff]
        %v916 = vld [vmem:[#allocation8 + $0x338] sm:$0xff]
        %v917 = vld [vmem:[#allocation8 + $0x340] sm:$0xff]
        %v918 = vld [vmem:[#allocation8 + $0x348] sm:$0xff]
        %v919 = vld [vmem:[#allocation8 + $0x350] sm:$0xff]
        %v920 = vld [vmem:[#allocation8 + $0x358] sm:$0xff]
        %v921 = vld [vmem:[#allocation8 + $0x360] sm:$0xff]
        %v922 = vld [vmem:[#allocation8 + $0x368] sm:$0xff]
        %v923 = vld [vmem:[#allocation8 + $0x370] sm:$0xff]
        %v924 = vld [vmem:[#allocation8 + $0x378] sm:$0xff]
        %v925 = vld [vmem:[#allocation8 + $0x380] sm:$0xff]
        %v926 = vld [vmem:[#allocation8 + $0x388] sm:$0xff]
        %v927 = vld [vmem:[#allocation8 + $0x390] sm:$0xff]
        %v928 = vld [vmem:[#allocation8 + $0x398] sm:$0xff]
        %v929 = vld [vmem:[#allocation8 + $0x3a0] sm:$0xff]
        %v930 = vld [vmem:[#allocation8 + $0x3a8] sm:$0xff]
        %v931 = vld [vmem:[#allocation8 + $0x3b0] sm:$0xff]
        %v932 = vld [vmem:[#allocation8 + $0x3b8] sm:$0xff]
        %v933 = vld [vmem:[#allocation8 + $0x3c0] sm:$0xff]
        %v934 = vld [vmem:[#allocation8 + $0x3c8] sm:$0xff]
        %v935 = vld [vmem:[#allocation8 + $0x3d0] sm:$0xff]
        %v936 = vld [vmem:[#allocation8 + $0x3d8] sm:$0xff]
        %v937 = vld [vmem:[#allocation8 + $0x3e0] sm:$0xff]
        %v938 = vld [vmem:[#allocation8 + $0x3e8] sm:$0xff]
        %v939 = vld [vmem:[#allocation8 + $0x3f0] sm:$0xff]
        %v940 = vld [vmem:[#allocation8 + $0x3f8] sm:$0xff]
        %v941 = vld [vmem:[#allocation8 + $0x400] sm:$0xff]
        %v942 = vld [vmem:[#allocation8 + $0x408] sm:$0xff]
        %v943 = vld [vmem:[#allocation8 + $0x410] sm:$0xff]
        %v944 = vld [vmem:[#allocation8 + $0x418] sm:$0xff]
        %v945 = vld [vmem:[#allocation8 + $0x420] sm:$0xff]
        %v946 = vld [vmem:[#allocation8 + $0x428] sm:$0xff]
        %v947 = vld [vmem:[#allocation8 + $0x430] sm:$0xff]
        %v948 = vld [vmem:[#allocation8 + $0x438] sm:$0xff]
        %v949 = vld [vmem:[#allocation8 + $0x440] sm:$0xff]
        %v950 = vld [vmem:[#allocation8 + $0x448] sm:$0xff]
        %v951 = vld [vmem:[#allocation8 + $0x450] sm:$0xff]
        %v952 = vld [vmem:[#allocation8 + $0x458] sm:$0xff]
        %v953 = vld [vmem:[#allocation8 + $0x460] sm:$0xff]
        %v954 = vld [vmem:[#allocation8 + $0x468] sm:$0xff]
        %v955 = vld [vmem:[#allocation8 + $0x470] sm:$0xff]
        %v956 = vld [vmem:[#allocation8 + $0x478] sm:$0xff]
        %v957 = vld [vmem:[%s5] sm:$0x1]
        %v959 = vlaneseq
        %v960 = vshrl.u32 %v959, 7
        %v961 = vsub.s32 0, %v960
        %v962 = vrot.slane %v957, %v961
        %964 = vmatprep.subr.mxu0 0.0
        %965 = vmatpush1.msra.mxu0 %v828
        %966 = vmatprep.subr.mxu0 0.0
        %967 = vmatpush1.msra.mxu0 %v827
        %968 = vmatprep.subr.mxu0 0.0
        %969 = vmatpush1.msra.mxu0 %v826
        %970 = vmatprep.subr.mxu0 0.0
        %971 = vmatpush1.msra.mxu0 %v825
        %972 = vmatprep.subr.mxu0 0.0
        %973 = vmatpush1.msra.mxu0 %v824
        %974 = vmatprep.subr.mxu0 0.0
        %975 = vmatpush1.msra.mxu0 %v823
        %976 = vmatprep.subr.mxu0 0.0
        %977 = vmatpush1.msra.mxu0 %v822
        %978 = vmatprep.subr.mxu0 0.0
        %979 = vmatpush1.msra.mxu0 %v821
        %980 = vmatprep.subr.mxu0 0.0
        %981 = vmatpush1.msra.mxu0 %v820
        %982 = vmatprep.subr.mxu0 0.0
        %983 = vmatpush1.msra.mxu0 %v819
        %984 = vmatprep.subr.mxu0 0.0
        %985 = vmatpush1.msra.mxu0 %v818
        %986 = vmatprep.subr.mxu0 0.0
        %987 = vmatpush1.msra.mxu0 %v817
        %988 = vmatprep.subr.mxu0 0.0
        %989 = vmatpush1.msra.mxu0 %v816
        %990 = vmatprep.subr.mxu0 0.0
        %991 = vmatpush1.msra.mxu0 %v815
        %992 = vmatprep.subr.mxu0 0.0
        %993 = vmatpush1.msra.mxu0 %v814
        %994 = vmatprep.subr.mxu0 0.0
        %995 = vmatpush1.msra.mxu0 %v813
        %996 = vmatprep.subr.mxu0 0.0
        %997 = vmatpush2.msra.mxu0 %v844
        %998 = vmatprep.subr.mxu0 0.0
        %999 = vmatpush2.msra.mxu0 %v843
        %1000 = vmatprep.subr.mxu0 0.0
        %1001 = vmatpush2.msra.mxu0 %v842
        %1002 = vmatprep.subr.mxu0 0.0
        %1003 = vmatpush2.msra.mxu0 %v841
        %1004 = vmatprep.subr.mxu0 0.0
        %1005 = vmatpush2.msra.mxu0 %v840
        %1006 = vmatprep.subr.mxu0 0.0
        %1007 = vmatpush2.msra.mxu0 %v839
        %1008 = vmatprep.subr.mxu0 0.0
        %1009 = vmatpush2.msra.mxu0 %v838
        %1010 = vmatprep.subr.mxu0 0.0
        %1011 = vmatpush2.msra.mxu0 %v837
        %1012 = vmatprep.subr.mxu0 0.0
        %1013 = vmatpush2.msra.mxu0 %v836
        %1014 = vmatprep.subr.mxu0 0.0
        %1015 = vmatpush2.msra.mxu0 %v835
        %1016 = vmatprep.subr.mxu0 0.0
        %1017 = vmatpush2.msra.mxu0 %v834
        %1018 = vmatprep.subr.mxu0 0.0
        %1019 = vmatpush2.msra.mxu0 %v833
        %1020 = vmatprep.subr.mxu0 0.0
        %1021 = vmatpush2.msra.mxu0 %v832
        %1022 = vmatprep.subr.mxu0 0.0
        %1023 = vmatpush2.msra.mxu0 %v831
        %1024 = vmatprep.subr.mxu0 0.0
        %1025 = vmatpush2.msra.mxu0 %v830
        %1026 = vmatprep.subr.mxu0 0.0
        %1027 = vmatpush2.msra.mxu0 %v829
        %1028 = vmatprep.mubr.f32.mxu0 %v683
        %1029 = vmatmul.mubr.f32.gmra.mxu0 %v667
        %v1030 = vpop.f32.mrf.mxu0
        %v1031 = vadd.f32 %v962, %v1030
        %v1032 = vpop.f32.mrf.mxu0
        %1033 = vmatprep.mubr.f32.mxu0 %v684
        %1034 = vmatmul.mubr.f32.gmra.mxu0 %v668
        %v1035 = vpop.f32.mrf.mxu0
        %v1036 = vadd.f32 %v962, %v1035
        %v1037 = vpop.f32.mrf.mxu0
        %1038 = vmatprep.mubr.f32.mxu0 %v685
        %1039 = vmatmul.mubr.f32.gmra.mxu0 %v669
        %v1040 = vpop.f32.mrf.mxu0
        %v1041 = vadd.f32 %v962, %v1040
        %v1042 = vpop.f32.mrf.mxu0
        %1043 = vmatprep.mubr.f32.mxu0 %v686
        %1044 = vmatmul.mubr.f32.gmra.mxu0 %v670
        %v1045 = vpop.f32.mrf.mxu0
        %v1046 = vadd.f32 %v962, %v1045
        %v1047 = vpop.f32.mrf.mxu0
        %1048 = vmatprep.mubr.f32.mxu0 %v687
        %1049 = vmatmul.mubr.f32.gmra.mxu0 %v671
        %v1050 = vpop.f32.mrf.mxu0
        %v1051 = vadd.f32 %v962, %v1050
        %v1052 = vpop.f32.mrf.mxu0
        %1053 = vmatprep.mubr.f32.mxu0 %v688
        %1054 = vmatmul.mubr.f32.gmra.mxu0 %v672
        %v1055 = vpop.f32.mrf.mxu0
        %v1056 = vadd.f32 %v962, %v1055
        %v1057 = vpop.f32.mrf.mxu0
        %1058 = vmatprep.mubr.f32.mxu0 %v689
        %1059 = vmatmul.mubr.f32.gmra.mxu0 %v673
        %v1060 = vpop.f32.mrf.mxu0
        %v1061 = vadd.f32 %v962, %v1060
        %v1062 = vpop.f32.mrf.mxu0
        %1063 = vmatprep.mubr.f32.mxu0 %v690
        %1064 = vmatmul.mubr.f32.gmra.mxu0 %v674
        %v1065 = vpop.f32.mrf.mxu0
        %v1066 = vadd.f32 %v962, %v1065
        %v1067 = vpop.f32.mrf.mxu0
        %1068 = vmatprep.mubr.f32.mxu0 %v691
        %1069 = vmatmul.mubr.f32.gmra.mxu0 %v675
        %v1070 = vpop.f32.mrf.mxu0
        %v1071 = vadd.f32 %v962, %v1070
        %v1072 = vpop.f32.mrf.mxu0
        %1073 = vmatprep.mubr.f32.mxu0 %v692
        %1074 = vmatmul.mubr.f32.gmra.mxu0 %v676
        %v1075 = vpop.f32.mrf.mxu0
        %v1076 = vadd.f32 %v962, %v1075
        %v1077 = vpop.f32.mrf.mxu0
        %1078 = vmatprep.mubr.f32.mxu0 %v693
        %1079 = vmatmul.mubr.f32.gmra.mxu0 %v677
        %v1080 = vpop.f32.mrf.mxu0
        %v1081 = vadd.f32 %v962, %v1080
        %v1082 = vpop.f32.mrf.mxu0
        %1083 = vmatprep.mubr.f32.mxu0 %v694
        %1084 = vmatmul.mubr.f32.gmra.mxu0 %v678
        %v1085 = vpop.f32.mrf.mxu0
        %v1086 = vadd.f32 %v962, %v1085
        %v1087 = vpop.f32.mrf.mxu0
        %1088 = vmatprep.mubr.f32.mxu0 %v695
        %1089 = vmatmul.mubr.f32.gmra.mxu0 %v679
        %v1090 = vpop.f32.mrf.mxu0
        %v1091 = vadd.f32 %v962, %v1090
        %v1092 = vpop.f32.mrf.mxu0
        %1093 = vmatprep.mubr.f32.mxu0 %v696
        %1094 = vmatmul.mubr.f32.gmra.mxu0 %v680
        %v1095 = vpop.f32.mrf.mxu0
        %v1096 = vadd.f32 %v962, %v1095
        %v1097 = vpop.f32.mrf.mxu0
        %1098 = vmatprep.mubr.f32.mxu0 %v697
        %1099 = vmatmul.mubr.f32.gmra.mxu0 %v681
        %v1100 = vpop.f32.mrf.mxu0
        %v1101 = vadd.f32 %v962, %v1100
        %v1102 = vpop.f32.mrf.mxu0
        %1103 = vmatprep.mubr.f32.mxu0 %v698
        %1104 = vmatmul.mubr.f32.gmra.mxu0 %v682
        %v1105 = vpop.f32.mrf.mxu0
        %v1106 = vadd.f32 %v962, %v1105
        %v1107 = vpop.f32.mrf.mxu0
        %1108 = vdwg.mxu0
        %1109 = vmatprep.subr.mxu0 0.0
        %1110 = vmatpush1.msra.mxu0 %v860
        %1111 = vmatprep.subr.mxu0 0.0
        %1112 = vmatpush1.msra.mxu0 %v859
        %1113 = vmatprep.subr.mxu0 0.0
        %1114 = vmatpush1.msra.mxu0 %v858
        %1115 = vmatprep.subr.mxu0 0.0
        %1116 = vmatpush1.msra.mxu0 %v857
        %1117 = vmatprep.subr.mxu0 0.0
        %1118 = vmatpush1.msra.mxu0 %v856
        %1119 = vmatprep.subr.mxu0 0.0
        %1120 = vmatpush1.msra.mxu0 %v855
        %1121 = vmatprep.subr.mxu0 0.0
        %1122 = vmatpush1.msra.mxu0 %v854
        %1123 = vmatprep.subr.mxu0 0.0
        %1124 = vmatpush1.msra.mxu0 %v853
        %1125 = vmatprep.subr.mxu0 0.0
        %1126 = vmatpush1.msra.mxu0 %v852
        %1127 = vmatprep.subr.mxu0 0.0
        %1128 = vmatpush1.msra.mxu0 %v851
        %1129 = vmatprep.subr.mxu0 0.0
        %1130 = vmatpush1.msra.mxu0 %v850
        %1131 = vmatprep.subr.mxu0 0.0
        %1132 = vmatpush1.msra.mxu0 %v849
        %1133 = vmatprep.subr.mxu0 0.0
        %1134 = vmatpush1.msra.mxu0 %v848
        %1135 = vmatprep.subr.mxu0 0.0
        %1136 = vmatpush1.msra.mxu0 %v847
        %1137 = vmatprep.subr.mxu0 0.0
        %1138 = vmatpush1.msra.mxu0 %v846
        %1139 = vmatprep.subr.mxu0 0.0
        %1140 = vmatpush1.msra.mxu0 %v845
        %1141 = vmatprep.subr.mxu0 0.0
        %1142 = vmatpush2.msra.mxu0 %v876
        %1143 = vmatprep.subr.mxu0 0.0
        %1144 = vmatpush2.msra.mxu0 %v875
        %1145 = vmatprep.subr.mxu0 0.0
        %1146 = vmatpush2.msra.mxu0 %v874
        %1147 = vmatprep.subr.mxu0 0.0
        %1148 = vmatpush2.msra.mxu0 %v873
        %1149 = vmatprep.subr.mxu0 0.0
        %1150 = vmatpush2.msra.mxu0 %v872
        %1151 = vmatprep.subr.mxu0 0.0
        %1152 = vmatpush2.msra.mxu0 %v871
        %1153 = vmatprep.subr.mxu0 0.0
        %1154 = vmatpush2.msra.mxu0 %v870
        %1155 = vmatprep.subr.mxu0 0.0
        %1156 = vmatpush2.msra.mxu0 %v869
        %1157 = vmatprep.subr.mxu0 0.0
        %1158 = vmatpush2.msra.mxu0 %v868
        %1159 = vmatprep.subr.mxu0 0.0
        %1160 = vmatpush2.msra.mxu0 %v867
        %1161 = vmatprep.subr.mxu0 0.0
        %1162 = vmatpush2.msra.mxu0 %v866
        %1163 = vmatprep.subr.mxu0 0.0
        %1164 = vmatpush2.msra.mxu0 %v865
        %1165 = vmatprep.subr.mxu0 0.0
        %1166 = vmatpush2.msra.mxu0 %v864
        %1167 = vmatprep.subr.mxu0 0.0
        %1168 = vmatpush2.msra.mxu0 %v863
        %1169 = vmatprep.subr.mxu0 0.0
        %1170 = vmatpush2.msra.mxu0 %v862
        %1171 = vmatprep.subr.mxu0 0.0
        %1172 = vmatpush2.msra.mxu0 %v861
        %1173 = vmatprep.mubr.f32.mxu0 %v716
        %1174 = vmatmul.mubr.f32.gmra.mxu0 %v699
        %v1175 = vpop.f32.mrf.mxu0
        %v1176 = vadd.f32 %v1031, %v1175
        %v1177 = vpop.f32.mrf.mxu0
        %1178 = vmatprep.mubr.f32.mxu0 %v717
        %1179 = vmatmul.mubr.f32.gmra.mxu0 %v700
        %v1180 = vpop.f32.mrf.mxu0
        %v1181 = vadd.f32 %v1036, %v1180
        %v1182 = vpop.f32.mrf.mxu0
        %1183 = vmatprep.mubr.f32.mxu0 %v718
        %1184 = vmatmul.mubr.f32.gmra.mxu0 %v701
        %v1185 = vpop.f32.mrf.mxu0
        %v1186 = vadd.f32 %v1041, %v1185
        %v1187 = vpop.f32.mrf.mxu0
        %1188 = vmatprep.mubr.f32.mxu0 %v719
        %1189 = vmatmul.mubr.f32.gmra.mxu0 %v702
        %v1190 = vpop.f32.mrf.mxu0
        %v1191 = vadd.f32 %v1046, %v1190
        %v1192 = vpop.f32.mrf.mxu0
        %1193 = vmatprep.mubr.f32.mxu0 %v720
        %1194 = vmatmul.mubr.f32.gmra.mxu0 %v703
        %v1195 = vpop.f32.mrf.mxu0
        %v1196 = vadd.f32 %v1051, %v1195
        %v1197 = vpop.f32.mrf.mxu0
        %1198 = vmatprep.mubr.f32.mxu0 %v721
        %1199 = vmatmul.mubr.f32.gmra.mxu0 %v704
        %v1200 = vpop.f32.mrf.mxu0
        %v1201 = vadd.f32 %v1056, %v1200
        %v1202 = vpop.f32.mrf.mxu0
        %1203 = vmatprep.mubr.f32.mxu0 %v722
        %1204 = vmatmul.mubr.f32.gmra.mxu0 %v705
        %v1205 = vpop.f32.mrf.mxu0
        %v1206 = vadd.f32 %v1061, %v1205
        %v1207 = vpop.f32.mrf.mxu0
        %1208 = vmatprep.mubr.f32.mxu0 %v723
        %1209 = vmatmul.mubr.f32.gmra.mxu0 %v706
        %v1210 = vpop.f32.mrf.mxu0
        %v1211 = vadd.f32 %v1066, %v1210
        %v1212 = vpop.f32.mrf.mxu0
        %1213 = vmatprep.mubr.f32.mxu0 %v724
        %1214 = vmatmul.mubr.f32.gmra.mxu0 %v707
        %v1215 = vpop.f32.mrf.mxu0
        %v1216 = vadd.f32 %v1071, %v1215
        %v1217 = vpop.f32.mrf.mxu0
        %1218 = vmatprep.mubr.f32.mxu0 %v725
        %1219 = vmatmul.mubr.f32.gmra.mxu0 %v708
        %v1220 = vpop.f32.mrf.mxu0
        %v1221 = vadd.f32 %v1076, %v1220
        %v1222 = vpop.f32.mrf.mxu0
        %1223 = vmatprep.mubr.f32.mxu0 %v726
        %1224 = vmatmul.mubr.f32.gmra.mxu0 %v709
        %v1225 = vpop.f32.mrf.mxu0
        %v1226 = vadd.f32 %v1081, %v1225
        %v1227 = vpop.f32.mrf.mxu0
        %1228 = vmatprep.mubr.f32.mxu0 %v727
        %1229 = vmatmul.mubr.f32.gmra.mxu0 %v710
        %v1230 = vpop.f32.mrf.mxu0
        %v1231 = vadd.f32 %v1086, %v1230
        %v1232 = vpop.f32.mrf.mxu0
        %1233 = vmatprep.mubr.f32.mxu0 %v728
        %1234 = vmatmul.mubr.f32.gmra.mxu0 %v711
        %v1235 = vpop.f32.mrf.mxu0
        %v1236 = vadd.f32 %v1091, %v1235
        %v1237 = vpop.f32.mrf.mxu0
        %1238 = vmatprep.mubr.f32.mxu0 %v729
        %1239 = vmatmul.mubr.f32.gmra.mxu0 %v712
        %v1240 = vpop.f32.mrf.mxu0
        %v1241 = vadd.f32 %v1096, %v1240
        %v1242 = vpop.f32.mrf.mxu0
        %1243 = vmatprep.mubr.f32.mxu0 %v730
        %1244 = vmatmul.mubr.f32.gmra.mxu0 %v713
        %v1245 = vpop.f32.mrf.mxu0
        %v1246 = vadd.f32 %v1101, %v1245
        %v1247 = vpop.f32.mrf.mxu0
        %1248 = vmatprep.mubr.f32.mxu0 %v731
        %1249 = vmatmul.mubr.f32.gmra.mxu0 %v714
        %v1250 = vpop.f32.mrf.mxu0
        %v1251 = vadd.f32 %v1106, %v1250
        %v1252 = vpop.f32.mrf.mxu0
        %1253 = vdwg.mxu0
        %1254 = vmatprep.subr.mxu0 0.0
        %1255 = vmatpush1.msra.mxu0 %v892
        %1256 = vmatprep.subr.mxu0 0.0
        %1257 = vmatpush1.msra.mxu0 %v891
        %1258 = vmatprep.subr.mxu0 0.0
        %1259 = vmatpush1.msra.mxu0 %v890
        %1260 = vmatprep.subr.mxu0 0.0
        %1261 = vmatpush1.msra.mxu0 %v889
        %1262 = vmatprep.subr.mxu0 0.0
        %1263 = vmatpush1.msra.mxu0 %v888
        %1264 = vmatprep.subr.mxu0 0.0
        %1265 = vmatpush1.msra.mxu0 %v887
        %1266 = vmatprep.subr.mxu0 0.0
        %1267 = vmatpush1.msra.mxu0 %v886
        %1268 = vmatprep.subr.mxu0 0.0
        %1269 = vmatpush1.msra.mxu0 %v885
        %1270 = vmatprep.subr.mxu0 0.0
        %1271 = vmatpush1.msra.mxu0 %v884
        %1272 = vmatprep.subr.mxu0 0.0
        %1273 = vmatpush1.msra.mxu0 %v883
        %1274 = vmatprep.subr.mxu0 0.0
        %1275 = vmatpush1.msra.mxu0 %v882
        %1276 = vmatprep.subr.mxu0 0.0
        %1277 = vmatpush1.msra.mxu0 %v881
        %1278 = vmatprep.subr.mxu0 0.0
        %1279 = vmatpush1.msra.mxu0 %v880
        %1280 = vmatprep.subr.mxu0 0.0
        %1281 = vmatpush1.msra.mxu0 %v879
        %1282 = vmatprep.subr.mxu0 0.0
        %1283 = vmatpush1.msra.mxu0 %v878
        %1284 = vmatprep.subr.mxu0 0.0
        %1285 = vmatpush1.msra.mxu0 %v877
        %1286 = vmatprep.subr.mxu0 0.0
        %1287 = vmatpush2.msra.mxu0 %v908
        %1288 = vmatprep.subr.mxu0 0.0
        %1289 = vmatpush2.msra.mxu0 %v907
        %1290 = vmatprep.subr.mxu0 0.0
        %1291 = vmatpush2.msra.mxu0 %v906
        %1292 = vmatprep.subr.mxu0 0.0
        %1293 = vmatpush2.msra.mxu0 %v905
        %1294 = vmatprep.subr.mxu0 0.0
        %1295 = vmatpush2.msra.mxu0 %v904
        %1296 = vmatprep.subr.mxu0 0.0
        %1297 = vmatpush2.msra.mxu0 %v903
        %1298 = vmatprep.subr.mxu0 0.0
        %1299 = vmatpush2.msra.mxu0 %v902
        %1300 = vmatprep.subr.mxu0 0.0
        %1301 = vmatpush2.msra.mxu0 %v901
        %1302 = vmatprep.subr.mxu0 0.0
        %1303 = vmatpush2.msra.mxu0 %v900
        %1304 = vmatprep.subr.mxu0 0.0
        %1305 = vmatpush2.msra.mxu0 %v899
        %1306 = vmatprep.subr.mxu0 0.0
        %1307 = vmatpush2.msra.mxu0 %v898
        %1308 = vmatprep.subr.mxu0 0.0
        %1309 = vmatpush2.msra.mxu0 %v897
        %1310 = vmatprep.subr.mxu0 0.0
        %1311 = vmatpush2.msra.mxu0 %v896
        %1312 = vmatprep.subr.mxu0 0.0
        %1313 = vmatpush2.msra.mxu0 %v895
        %1314 = vmatprep.subr.mxu0 0.0
        %1315 = vmatpush2.msra.mxu0 %v894
        %1316 = vmatprep.subr.mxu0 0.0
        %1317 = vmatpush2.msra.mxu0 %v893
        %1318 = vmatprep.mubr.f32.mxu0 %v748
        %1319 = vmatmul.mubr.f32.gmra.mxu0 %v732
        %v1320 = vpop.f32.mrf.mxu0
        %v1321 = vadd.f32 %v1176, %v1320
        %v1322 = vpop.f32.mrf.mxu0
        %1323 = vmatprep.mubr.f32.mxu0 %v749
        %1324 = vmatmul.mubr.f32.gmra.mxu0 %v733
        %v1325 = vpop.f32.mrf.mxu0
        %v1326 = vadd.f32 %v1181, %v1325
        %v1327 = vpop.f32.mrf.mxu0
        %1328 = vmatprep.mubr.f32.mxu0 %v750
        %1329 = vmatmul.mubr.f32.gmra.mxu0 %v734
        %v1330 = vpop.f32.mrf.mxu0
        %v1331 = vadd.f32 %v1186, %v1330
        %v1332 = vpop.f32.mrf.mxu0
        %1333 = vmatprep.mubr.f32.mxu0 %v751
        %1334 = vmatmul.mubr.f32.gmra.mxu0 %v735
        %v1335 = vpop.f32.mrf.mxu0
        %v1336 = vadd.f32 %v1191, %v1335
        %v1337 = vpop.f32.mrf.mxu0
        %1338 = vmatprep.mubr.f32.mxu0 %v752
        %1339 = vmatmul.mubr.f32.gmra.mxu0 %v736
        %v1340 = vpop.f32.mrf.mxu0
        %v1341 = vadd.f32 %v1196, %v1340
        %v1342 = vpop.f32.mrf.mxu0
        %1343 = vmatprep.mubr.f32.mxu0 %v753
        %1344 = vmatmul.mubr.f32.gmra.mxu0 %v737
        %v1345 = vpop.f32.mrf.mxu0
        %v1346 = vadd.f32 %v1201, %v1345
        %v1347 = vpop.f32.mrf.mxu0
        %1348 = vmatprep.mubr.f32.mxu0 %v754
        %1349 = vmatmul.mubr.f32.gmra.mxu0 %v738
        %v1350 = vpop.f32.mrf.mxu0
        %v1351 = vadd.f32 %v1206, %v1350
        %v1352 = vpop.f32.mrf.mxu0
        %1353 = vmatprep.mubr.f32.mxu0 %v755
        %1354 = vmatmul.mubr.f32.gmra.mxu0 %v739
        %v1355 = vpop.f32.mrf.mxu0
        %v1356 = vadd.f32 %v1211, %v1355
        %v1357 = vpop.f32.mrf.mxu0
        %1358 = vmatprep.mubr.f32.mxu0 %v756
        %1359 = vmatmul.mubr.f32.gmra.mxu0 %v740
        %v1360 = vpop.f32.mrf.mxu0
        %v1361 = vadd.f32 %v1216, %v1360
        %v1362 = vpop.f32.mrf.mxu0
        %1363 = vmatprep.mubr.f32.mxu0 %v757
        %1364 = vmatmul.mubr.f32.gmra.mxu0 %v741
        %v1365 = vpop.f32.mrf.mxu0
        %v1366 = vadd.f32 %v1221, %v1365
        %v1367 = vpop.f32.mrf.mxu0
        %1368 = vmatprep.mubr.f32.mxu0 %v758
        %1369 = vmatmul.mubr.f32.gmra.mxu0 %v742
        %v1370 = vpop.f32.mrf.mxu0
        %v1371 = vadd.f32 %v1226, %v1370
        %v1372 = vpop.f32.mrf.mxu0
        %1373 = vmatprep.mubr.f32.mxu0 %v759
        %1374 = vmatmul.mubr.f32.gmra.mxu0 %v743
        %v1375 = vpop.f32.mrf.mxu0
        %v1376 = vadd.f32 %v1231, %v1375
        %v1377 = vpop.f32.mrf.mxu0
        %1378 = vmatprep.mubr.f32.mxu0 %v760
        %1379 = vmatmul.mubr.f32.gmra.mxu0 %v744
        %v1380 = vpop.f32.mrf.mxu0
        %v1381 = vadd.f32 %v1236, %v1380
        %v1382 = vpop.f32.mrf.mxu0
        %1383 = vmatprep.mubr.f32.mxu0 %v761
        %1384 = vmatmul.mubr.f32.gmra.mxu0 %v745
        %v1385 = vpop.f32.mrf.mxu0
        %v1386 = vadd.f32 %v1241, %v1385
        %v1387 = vpop.f32.mrf.mxu0
        %1388 = vmatprep.mubr.f32.mxu0 %v762
        %1389 = vmatmul.mubr.f32.gmra.mxu0 %v746
        %v1390 = vpop.f32.mrf.mxu0
        %v1391 = vadd.f32 %v1246, %v1390
        %v1392 = vpop.f32.mrf.mxu0
        %1393 = vmatprep.mubr.f32.mxu0 %v763
        %1394 = vmatmul.mubr.f32.gmra.mxu0 %v747
        %v1395 = vpop.f32.mrf.mxu0
        %v1396 = vadd.f32 %v1251, %v1395
        %v1397 = vpop.f32.mrf.mxu0
        %1398 = vdwg.mxu0
        %1399 = vmatprep.subr.mxu0 0.0
        %1400 = vmatpush1.msra.mxu0 %v924
        %1401 = vmatprep.subr.mxu0 0.0
        %1402 = vmatpush1.msra.mxu0 %v923
        %1403 = vmatprep.subr.mxu0 0.0
        %1404 = vmatpush1.msra.mxu0 %v922
        %1405 = vmatprep.subr.mxu0 0.0
        %1406 = vmatpush1.msra.mxu0 %v921
        %1407 = vmatprep.subr.mxu0 0.0
        %1408 = vmatpush1.msra.mxu0 %v920
        %1409 = vmatprep.subr.mxu0 0.0
        %1410 = vmatpush1.msra.mxu0 %v919
        %1411 = vmatprep.subr.mxu0 0.0
        %1412 = vmatpush1.msra.mxu0 %v918
        %1413 = vmatprep.subr.mxu0 0.0
        %1414 = vmatpush1.msra.mxu0 %v917
        %1415 = vmatprep.subr.mxu0 0.0
        %1416 = vmatpush1.msra.mxu0 %v916
        %1417 = vmatprep.subr.mxu0 0.0
        %1418 = vmatpush1.msra.mxu0 %v915
        %1419 = vmatprep.subr.mxu0 0.0
        %1420 = vmatpush1.msra.mxu0 %v914
        %1421 = vmatprep.subr.mxu0 0.0
        %1422 = vmatpush1.msra.mxu0 %v913
        %1423 = vmatprep.subr.mxu0 0.0
        %1424 = vmatpush1.msra.mxu0 %v912
        %1425 = vmatprep.subr.mxu0 0.0
        %1426 = vmatpush1.msra.mxu0 %v911
        %1427 = vmatprep.subr.mxu0 0.0
        %1428 = vmatpush1.msra.mxu0 %v910
        %1429 = vmatprep.subr.mxu0 0.0
        %1430 = vmatpush1.msra.mxu0 %v909
        %1431 = vmatprep.subr.mxu0 0.0
        %1432 = vmatpush2.msra.mxu0 %v940
        %1433 = vmatprep.subr.mxu0 0.0
        %1434 = vmatpush2.msra.mxu0 %v939
        %1435 = vmatprep.subr.mxu0 0.0
        %1436 = vmatpush2.msra.mxu0 %v938
        %1437 = vmatprep.subr.mxu0 0.0
        %1438 = vmatpush2.msra.mxu0 %v937
        %1439 = vmatprep.subr.mxu0 0.0
        %1440 = vmatpush2.msra.mxu0 %v936
        %1441 = vmatprep.subr.mxu0 0.0
        %1442 = vmatpush2.msra.mxu0 %v935
        %1443 = vmatprep.subr.mxu0 0.0
        %1444 = vmatpush2.msra.mxu0 %v934
        %1445 = vmatprep.subr.mxu0 0.0
        %1446 = vmatpush2.msra.mxu0 %v933
        %1447 = vmatprep.subr.mxu0 0.0
        %1448 = vmatpush2.msra.mxu0 %v932
        %1449 = vmatprep.subr.mxu0 0.0
        %1450 = vmatpush2.msra.mxu0 %v931
        %1451 = vmatprep.subr.mxu0 0.0
        %1452 = vmatpush2.msra.mxu0 %v930
        %1453 = vmatprep.subr.mxu0 0.0
        %1454 = vmatpush2.msra.mxu0 %v929
        %1455 = vmatprep.subr.mxu0 0.0
        %1456 = vmatpush2.msra.mxu0 %v928
        %1457 = vmatprep.subr.mxu0 0.0
        %1458 = vmatpush2.msra.mxu0 %v927
        %1459 = vmatprep.subr.mxu0 0.0
        %1460 = vmatpush2.msra.mxu0 %v926
        %1461 = vmatprep.subr.mxu0 0.0
        %1462 = vmatpush2.msra.mxu0 %v925
        %1463 = vmatprep.mubr.f32.mxu0 %v781
        %1464 = vmatmul.mubr.f32.gmra.mxu0 %v765
        %v1465 = vpop.f32.mrf.mxu0
        %v1466 = vadd.f32 %v1321, %v1465
        %v1467 = vpop.f32.mrf.mxu0
        %1468 = vmatprep.mubr.f32.mxu0 %v782
        %1469 = vmatmul.mubr.f32.gmra.mxu0 %v766
        %v1470 = vpop.f32.mrf.mxu0
        %v1471 = vadd.f32 %v1326, %v1470
        %v1472 = vpop.f32.mrf.mxu0
        %1473 = vmatprep.mubr.f32.mxu0 %v783
        %1474 = vmatmul.mubr.f32.gmra.mxu0 %v767
        %v1475 = vpop.f32.mrf.mxu0
        %v1476 = vadd.f32 %v1331, %v1475
        %v1477 = vpop.f32.mrf.mxu0
        %1478 = vmatprep.mubr.f32.mxu0 %v784
        %1479 = vmatmul.mubr.f32.gmra.mxu0 %v768
        %v1480 = vpop.f32.mrf.mxu0
        %v1481 = vadd.f32 %v1336, %v1480
        %v1482 = vpop.f32.mrf.mxu0
        %1483 = vmatprep.mubr.f32.mxu0 %v785
        %1484 = vmatmul.mubr.f32.gmra.mxu0 %v769
        %v1485 = vpop.f32.mrf.mxu0
        %v1486 = vadd.f32 %v1341, %v1485
        %v1487 = vpop.f32.mrf.mxu0
        %1488 = vmatprep.mubr.f32.mxu0 %v786
        %1489 = vmatmul.mubr.f32.gmra.mxu0 %v770
        %v1490 = vpop.f32.mrf.mxu0
        %v1491 = vadd.f32 %v1346, %v1490
        %v1492 = vpop.f32.mrf.mxu0
        %1493 = vmatprep.mubr.f32.mxu0 %v787
        %1494 = vmatmul.mubr.f32.gmra.mxu0 %v771
        %v1495 = vpop.f32.mrf.mxu0
        %v1496 = vadd.f32 %v1351, %v1495
        %v1497 = vpop.f32.mrf.mxu0
        %1498 = vmatprep.mubr.f32.mxu0 %v788
        %1499 = vmatmul.mubr.f32.gmra.mxu0 %v772
        %v1500 = vpop.f32.mrf.mxu0
        %v1501 = vadd.f32 %v1356, %v1500
        %v1502 = vpop.f32.mrf.mxu0
        %1503 = vmatprep.mubr.f32.mxu0 %v789
        %1504 = vmatmul.mubr.f32.gmra.mxu0 %v773
        %v1505 = vpop.f32.mrf.mxu0
        %v1506 = vadd.f32 %v1361, %v1505
        %v1507 = vpop.f32.mrf.mxu0
        %1508 = vmatprep.mubr.f32.mxu0 %v790
        %1509 = vmatmul.mubr.f32.gmra.mxu0 %v774
        %v1510 = vpop.f32.mrf.mxu0
        %v1511 = vadd.f32 %v1366, %v1510
        %v1512 = vpop.f32.mrf.mxu0
        %1513 = vmatprep.mubr.f32.mxu0 %v791
        %1514 = vmatmul.mubr.f32.gmra.mxu0 %v775
        %v1515 = vpop.f32.mrf.mxu0
        %v1516 = vadd.f32 %v1371, %v1515
        %v1517 = vpop.f32.mrf.mxu0
        %1518 = vmatprep.mubr.f32.mxu0 %v792
        %1519 = vmatmul.mubr.f32.gmra.mxu0 %v776
        %v1520 = vpop.f32.mrf.mxu0
        %v1521 = vadd.f32 %v1376, %v1520
        %v1522 = vpop.f32.mrf.mxu0
        %1523 = vmatprep.mubr.f32.mxu0 %v793
        %1524 = vmatmul.mubr.f32.gmra.mxu0 %v777
        %v1525 = vpop.f32.mrf.mxu0
        %v1526 = vadd.f32 %v1381, %v1525
        %v1527 = vpop.f32.mrf.mxu0
        %1528 = vmatprep.mubr.f32.mxu0 %v794
        %1529 = vmatmul.mubr.f32.gmra.mxu0 %v778
        %v1530 = vpop.f32.mrf.mxu0
        %v1531 = vadd.f32 %v1386, %v1530
        %v1532 = vpop.f32.mrf.mxu0
        %1533 = vmatprep.mubr.f32.mxu0 %v795
        %1534 = vmatmul.mubr.f32.gmra.mxu0 %v779
        %v1535 = vpop.f32.mrf.mxu0
        %v1536 = vadd.f32 %v1391, %v1535
        %v1537 = vpop.f32.mrf.mxu0
        %1538 = vmatprep.mubr.f32.mxu0 %v796
        %1539 = vmatmul.mubr.f32.gmra.mxu0 %v780
        %v1540 = vpop.f32.mrf.mxu0
        %v1541 = vadd.f32 %v1396, %v1540
        %v1542 = vpop.f32.mrf.mxu0
        %1543 = vdwg.mxu0
        %1544 = vmatprep.subr.mxu0 0.0
        %1545 = vmatpush1.msra.mxu0 %v956
        %1546 = vmatprep.subr.mxu0 0.0
        %1547 = vmatpush1.msra.mxu0 %v955
        %1548 = vmatprep.subr.mxu0 0.0
        %1549 = vmatpush1.msra.mxu0 %v954
        %1550 = vmatprep.subr.mxu0 0.0
        %1551 = vmatpush1.msra.mxu0 %v953
        %1552 = vmatprep.subr.mxu0 0.0
        %1553 = vmatpush1.msra.mxu0 %v952
        %1554 = vmatprep.subr.mxu0 0.0
        %1555 = vmatpush1.msra.mxu0 %v951
        %1556 = vmatprep.subr.mxu0 0.0
        %1557 = vmatpush1.msra.mxu0 %v950
        %1558 = vmatprep.subr.mxu0 0.0
        %1559 = vmatpush1.msra.mxu0 %v949
        %1560 = vmatprep.subr.mxu0 0.0
        %1561 = vmatpush1.msra.mxu0 %v948
        %1562 = vmatprep.subr.mxu0 0.0
        %1563 = vmatpush1.msra.mxu0 %v947
        %1564 = vmatprep.subr.mxu0 0.0
        %1565 = vmatpush1.msra.mxu0 %v946
        %1566 = vmatprep.subr.mxu0 0.0
        %1567 = vmatpush1.msra.mxu0 %v945
        %1568 = vmatprep.subr.mxu0 0.0
        %1569 = vmatpush1.msra.mxu0 %v944
        %1570 = vmatprep.subr.mxu0 0.0
        %1571 = vmatpush1.msra.mxu0 %v943
        %1572 = vmatprep.subr.mxu0 0.0
        %1573 = vmatpush1.msra.mxu0 %v942
        %1574 = vmatprep.subr.mxu0 0.0
        %1575 = vmatpush1.msra.mxu0 %v941
        %1576 = vmatprep.subr.mxu0 0.0
        %1577 = vmatpush2.msra.mxu0 0.0
        %1578 = vmatprep.subr.mxu0 0.0
        %1579 = vmatpush2.msra.mxu0 0.0
        %1580 = vmatprep.subr.mxu0 0.0
        %1581 = vmatpush2.msra.mxu0 0.0
        %1582 = vmatprep.subr.mxu0 0.0
        %1583 = vmatpush2.msra.mxu0 0.0
        %1584 = vmatprep.subr.mxu0 0.0
        %1585 = vmatpush2.msra.mxu0 0.0
        %1586 = vmatprep.subr.mxu0 0.0
        %1587 = vmatpush2.msra.mxu0 0.0
        %1588 = vmatprep.subr.mxu0 0.0
        %1589 = vmatpush2.msra.mxu0 0.0
        %1590 = vmatprep.subr.mxu0 0.0
        %1591 = vmatpush2.msra.mxu0 0.0
        %1592 = vmatprep.subr.mxu0 0.0
        %1593 = vmatpush2.msra.mxu0 0.0
        %1594 = vmatprep.subr.mxu0 0.0
        %1595 = vmatpush2.msra.mxu0 0.0
        %1596 = vmatprep.subr.mxu0 0.0
        %1597 = vmatpush2.msra.mxu0 0.0
        %1598 = vmatprep.subr.mxu0 0.0
        %1599 = vmatpush2.msra.mxu0 0.0
        %1600 = vmatprep.subr.mxu0 0.0
        %1601 = vmatpush2.msra.mxu0 0.0
        %1602 = vmatprep.subr.mxu0 0.0
        %1603 = vmatpush2.msra.mxu0 0.0
        %1604 = vmatprep.subr.mxu0 0.0
        %1605 = vmatpush2.msra.mxu0 0.0
        %1606 = vmatprep.subr.mxu0 0.0
        %1607 = vmatpush2.msra.mxu0 0.0
        %1608 = vmatprep.mubr.f32.mxu0 0.0
        %1609 = vmatmul.mubr.f32.gmra.mxu0 %v797
        %v1610 = vpop.f32.mrf.mxu0
        %v1611 = vadd.f32 %v1466, %v1610
        %v1612 = vpop.f32.mrf.mxu0
        %1613 = vmatprep.mubr.f32.mxu0 0.0
        %1614 = vmatmul.mubr.f32.gmra.mxu0 %v798
        %v1615 = vpop.f32.mrf.mxu0
        %v1616 = vadd.f32 %v1471, %v1615
        %v1617 = vpop.f32.mrf.mxu0
        %1618 = vmatprep.mubr.f32.mxu0 0.0
        %1619 = vmatmul.mubr.f32.gmra.mxu0 %v799
        %v1620 = vpop.f32.mrf.mxu0
        %v1621 = vadd.f32 %v1476, %v1620
        %v1622 = vpop.f32.mrf.mxu0
        %1623 = vmatprep.mubr.f32.mxu0 0.0
        %1624 = vmatmul.mubr.f32.gmra.mxu0 %v800
        %v1625 = vpop.f32.mrf.mxu0
        %v1626 = vadd.f32 %v1481, %v1625
        %v1627 = vpop.f32.mrf.mxu0
        %1628 = vmatprep.mubr.f32.mxu0 0.0
        %1629 = vmatmul.mubr.f32.gmra.mxu0 %v801
        %v1630 = vpop.f32.mrf.mxu0
        %v1631 = vadd.f32 %v1486, %v1630
        %v1632 = vpop.f32.mrf.mxu0
        %1633 = vmatprep.mubr.f32.mxu0 0.0
        %1634 = vmatmul.mubr.f32.gmra.mxu0 %v802
        %v1635 = vpop.f32.mrf.mxu0
        %v1636 = vadd.f32 %v1491, %v1635
        %v1637 = vpop.f32.mrf.mxu0
        %1638 = vmatprep.mubr.f32.mxu0 0.0
        %1639 = vmatmul.mubr.f32.gmra.mxu0 %v803
        %v1640 = vpop.f32.mrf.mxu0
        %v1641 = vadd.f32 %v1496, %v1640
        %v1642 = vpop.f32.mrf.mxu0
        %1643 = vmatprep.mubr.f32.mxu0 0.0
        %1644 = vmatmul.mubr.f32.gmra.mxu0 %v804
        %v1645 = vpop.f32.mrf.mxu0
        %v1646 = vadd.f32 %v1501, %v1645
        %v1647 = vpop.f32.mrf.mxu0
        %1648 = vmatprep.mubr.f32.mxu0 0.0
        %1649 = vmatmul.mubr.f32.gmra.mxu0 %v805
        %v1650 = vpop.f32.mrf.mxu0
        %v1651 = vadd.f32 %v1506, %v1650
        %v1652 = vpop.f32.mrf.mxu0
        %1653 = vmatprep.mubr.f32.mxu0 0.0
        %1654 = vmatmul.mubr.f32.gmra.mxu0 %v806
        %v1655 = vpop.f32.mrf.mxu0
        %v1656 = vadd.f32 %v1511, %v1655
        %v1657 = vpop.f32.mrf.mxu0
        %1658 = vmatprep.mubr.f32.mxu0 0.0
        %1659 = vmatmul.mubr.f32.gmra.mxu0 %v807
        %v1660 = vpop.f32.mrf.mxu0
        %v1661 = vadd.f32 %v1516, %v1660
        %v1662 = vpop.f32.mrf.mxu0
        %1663 = vmatprep.mubr.f32.mxu0 0.0
        %1664 = vmatmul.mubr.f32.gmra.mxu0 %v808
        %v1665 = vpop.f32.mrf.mxu0
        %v1666 = vadd.f32 %v1521, %v1665
        %v1667 = vpop.f32.mrf.mxu0
        %1668 = vmatprep.mubr.f32.mxu0 0.0
        %1669 = vmatmul.mubr.f32.gmra.mxu0 %v809
        %v1670 = vpop.f32.mrf.mxu0
        %v1671 = vadd.f32 %v1526, %v1670
        %v1672 = vpop.f32.mrf.mxu0
        %1673 = vmatprep.mubr.f32.mxu0 0.0
        %1674 = vmatmul.mubr.f32.gmra.mxu0 %v810
        %v1675 = vpop.f32.mrf.mxu0
        %v1676 = vadd.f32 %v1531, %v1675
        %v1677 = vpop.f32.mrf.mxu0
        %1678 = vmatprep.mubr.f32.mxu0 0.0
        %1679 = vmatmul.mubr.f32.gmra.mxu0 %v811
        %v1680 = vpop.f32.mrf.mxu0
        %v1681 = vadd.f32 %v1536, %v1680
        %v1682 = vpop.f32.mrf.mxu0
        %1683 = vmatprep.mubr.f32.mxu0 0.0
        %1684 = vmatmul.mubr.f32.gmra.mxu0 %v812
        %v1685 = vpop.f32.mrf.mxu0
        %v1686 = vadd.f32 %v1541, %v1685
        %v1687 = vpop.f32.mrf.mxu0
        %1688 = vdwg.mxu0
        %v1689 = vmax.f32 %v1611, 0.0
        %v1690 = vmax.f32 %v1616, 0.0
        %v1691 = vmax.f32 %v1621, 0.0
        %v1692 = vmax.f32 %v1626, 0.0
        %v1693 = vmax.f32 %v1631, 0.0
        %v1694 = vmax.f32 %v1636, 0.0
        %v1695 = vmax.f32 %v1641, 0.0
        %v1696 = vmax.f32 %v1646, 0.0
        %v1697 = vmax.f32 %v1651, 0.0
        %v1698 = vmax.f32 %v1656, 0.0
        %v1699 = vmax.f32 %v1661, 0.0
        %v1700 = vmax.f32 %v1666, 0.0
        %v1701 = vmax.f32 %v1671, 0.0
        %v1702 = vmax.f32 %v1676, 0.0
        %v1703 = vmax.f32 %v1681, 0.0
        %v1704 = vmax.f32 %v1686, 0.0
        %v1705 = vld [vmem:[#allocation10] sm:$0xff]
        %v1706 = vld [vmem:[#allocation10 + $0x8] sm:$0xff]
        %v1707 = vld [vmem:[#allocation10 + $0x10] sm:$0xff]
        %v1708 = vld [vmem:[#allocation10 + $0x18] sm:$0xff]
        %v1709 = vld [vmem:[#allocation10 + $0x20] sm:$0xff]
        %v1710 = vld [vmem:[#allocation10 + $0x28] sm:$0xff]
        %v1711 = vld [vmem:[#allocation10 + $0x30] sm:$0xff]
        %v1712 = vld [vmem:[#allocation10 + $0x38] sm:$0xff]
        %v1713 = vld [vmem:[#allocation10 + $0x40] sm:$0xff]
        %v1714 = vld [vmem:[#allocation10 + $0x48] sm:$0xff]
        %v1715 = vld [vmem:[#allocation10 + $0x50] sm:$0xff]
        %v1716 = vld [vmem:[#allocation10 + $0x58] sm:$0xff]
        %v1717 = vld [vmem:[#allocation10 + $0x60] sm:$0xff]
        %v1718 = vld [vmem:[#allocation10 + $0x68] sm:$0xff]
        %v1719 = vld [vmem:[#allocation10 + $0x70] sm:$0xff]
        %v1720 = vld [vmem:[#allocation10 + $0x78] sm:$0xff]
        %v1721 = vld [vmem:[%s6] sm:$0x1]
        %v1723 = vlaneseq
        %v1724 = vshrl.u32 %v1723, 7
        %v1725 = vsub.s32 0, %v1724
        %v1726 = vrot.slane %v1721, %v1725
        %1728 = vmatprep.subr.mxu0 0.0
        %1729 = vmatpush1.msra.mxu0 %v1720
        %1730 = vmatprep.subr.mxu0 0.0
        %1731 = vmatpush1.msra.mxu0 %v1719
        %1732 = vmatprep.subr.mxu0 0.0
        %1733 = vmatpush1.msra.mxu0 %v1718
        %1734 = vmatprep.subr.mxu0 0.0
        %1735 = vmatpush1.msra.mxu0 %v1717
        %1736 = vmatprep.subr.mxu0 0.0
        %1737 = vmatpush1.msra.mxu0 %v1716
        %1738 = vmatprep.subr.mxu0 0.0
        %1739 = vmatpush1.msra.mxu0 %v1715
        %1740 = vmatprep.subr.mxu0 0.0
        %1741 = vmatpush1.msra.mxu0 %v1714
        %1742 = vmatprep.subr.mxu0 0.0
        %1743 = vmatpush1.msra.mxu0 %v1713
        %1744 = vmatprep.subr.mxu0 0.0
        %1745 = vmatpush1.msra.mxu0 %v1712
        %1746 = vmatprep.subr.mxu0 0.0
        %1747 = vmatpush1.msra.mxu0 %v1711
        %1748 = vmatprep.subr.mxu0 0.0
        %1749 = vmatpush1.msra.mxu0 %v1710
        %1750 = vmatprep.subr.mxu0 0.0
        %1751 = vmatpush1.msra.mxu0 %v1709
        %1752 = vmatprep.subr.mxu0 0.0
        %1753 = vmatpush1.msra.mxu0 %v1708
        %1754 = vmatprep.subr.mxu0 0.0
        %1755 = vmatpush1.msra.mxu0 %v1707
        %1756 = vmatprep.subr.mxu0 0.0
        %1757 = vmatpush1.msra.mxu0 %v1706
        %1758 = vmatprep.subr.mxu0 0.0
        %1759 = vmatpush1.msra.mxu0 %v1705
        %1760 = vmatprep.subr.mxu0 0.0
        %1761 = vmatpush2.msra.mxu0 0.0
        %1762 = vmatprep.subr.mxu0 0.0
        %1763 = vmatpush2.msra.mxu0 0.0
        %1764 = vmatprep.subr.mxu0 0.0
        %1765 = vmatpush2.msra.mxu0 0.0
        %1766 = vmatprep.subr.mxu0 0.0
        %1767 = vmatpush2.msra.mxu0 0.0
        %1768 = vmatprep.subr.mxu0 0.0
        %1769 = vmatpush2.msra.mxu0 0.0
        %1770 = vmatprep.subr.mxu0 0.0
        %1771 = vmatpush2.msra.mxu0 0.0
        %1772 = vmatprep.subr.mxu0 0.0
        %1773 = vmatpush2.msra.mxu0 0.0
        %1774 = vmatprep.subr.mxu0 0.0
        %1775 = vmatpush2.msra.mxu0 0.0
        %1776 = vmatprep.subr.mxu0 0.0
        %1777 = vmatpush2.msra.mxu0 0.0
        %1778 = vmatprep.subr.mxu0 0.0
        %1779 = vmatpush2.msra.mxu0 0.0
        %1780 = vmatprep.subr.mxu0 0.0
        %1781 = vmatpush2.msra.mxu0 0.0
        %1782 = vmatprep.subr.mxu0 0.0
        %1783 = vmatpush2.msra.mxu0 0.0
        %1784 = vmatprep.subr.mxu0 0.0
        %1785 = vmatpush2.msra.mxu0 0.0
        %1786 = vmatprep.subr.mxu0 0.0
        %1787 = vmatpush2.msra.mxu0 0.0
        %1788 = vmatprep.subr.mxu0 0.0
        %1789 = vmatpush2.msra.mxu0 0.0
        %1790 = vmatprep.subr.mxu0 0.0
        %1791 = vmatpush2.msra.mxu0 0.0
        %1792 = vmatprep.mubr.f32.mxu0 0.0
        %1793 = vmatmul.mubr.f32.gmra.mxu0 %v1689
        %v1794 = vpop.f32.mrf.mxu0
        %v1795 = vadd.f32 %v1726, %v1794
        %v1796 = vpop.f32.mrf.mxu0
        %1797 = vmatprep.mubr.f32.mxu0 0.0
        %1798 = vmatmul.mubr.f32.gmra.mxu0 %v1690
        %v1799 = vpop.f32.mrf.mxu0
        %v1800 = vadd.f32 %v1726, %v1799
        %v1801 = vpop.f32.mrf.mxu0
        %1802 = vmatprep.mubr.f32.mxu0 0.0
        %1803 = vmatmul.mubr.f32.gmra.mxu0 %v1691
        %v1804 = vpop.f32.mrf.mxu0
        %v1805 = vadd.f32 %v1726, %v1804
        %v1806 = vpop.f32.mrf.mxu0
        %1807 = vmatprep.mubr.f32.mxu0 0.0
        %1808 = vmatmul.mubr.f32.gmra.mxu0 %v1692
        %v1809 = vpop.f32.mrf.mxu0
        %v1810 = vadd.f32 %v1726, %v1809
        %v1811 = vpop.f32.mrf.mxu0
        %1812 = vmatprep.mubr.f32.mxu0 0.0
        %1813 = vmatmul.mubr.f32.gmra.mxu0 %v1693
        %v1814 = vpop.f32.mrf.mxu0
        %v1815 = vadd.f32 %v1726, %v1814
        %v1816 = vpop.f32.mrf.mxu0
        %1817 = vmatprep.mubr.f32.mxu0 0.0
        %1818 = vmatmul.mubr.f32.gmra.mxu0 %v1694
        %v1819 = vpop.f32.mrf.mxu0
        %v1820 = vadd.f32 %v1726, %v1819
        %v1821 = vpop.f32.mrf.mxu0
        %1822 = vmatprep.mubr.f32.mxu0 0.0
        %1823 = vmatmul.mubr.f32.gmra.mxu0 %v1695
        %v1824 = vpop.f32.mrf.mxu0
        %v1825 = vadd.f32 %v1726, %v1824
        %v1826 = vpop.f32.mrf.mxu0
        %1827 = vmatprep.mubr.f32.mxu0 0.0
        %1828 = vmatmul.mubr.f32.gmra.mxu0 %v1696
        %v1829 = vpop.f32.mrf.mxu0
        %v1830 = vadd.f32 %v1726, %v1829
        %v1831 = vpop.f32.mrf.mxu0
        %1832 = vmatprep.mubr.f32.mxu0 0.0
        %1833 = vmatmul.mubr.f32.gmra.mxu0 %v1697
        %v1834 = vpop.f32.mrf.mxu0
        %v1835 = vadd.f32 %v1726, %v1834
        %v1836 = vpop.f32.mrf.mxu0
        %1837 = vmatprep.mubr.f32.mxu0 0.0
        %1838 = vmatmul.mubr.f32.gmra.mxu0 %v1698
        %v1839 = vpop.f32.mrf.mxu0
        %v1840 = vadd.f32 %v1726, %v1839
        %v1841 = vpop.f32.mrf.mxu0
        %1842 = vmatprep.mubr.f32.mxu0 0.0
        %1843 = vmatmul.mubr.f32.gmra.mxu0 %v1699
        %v1844 = vpop.f32.mrf.mxu0
        %v1845 = vadd.f32 %v1726, %v1844
        %v1846 = vpop.f32.mrf.mxu0
        %1847 = vmatprep.mubr.f32.mxu0 0.0
        %1848 = vmatmul.mubr.f32.gmra.mxu0 %v1700
        %v1849 = vpop.f32.mrf.mxu0
        %v1850 = vadd.f32 %v1726, %v1849
        %v1851 = vpop.f32.mrf.mxu0
        %1852 = vmatprep.mubr.f32.mxu0 0.0
        %1853 = vmatmul.mubr.f32.gmra.mxu0 %v1701
        %v1854 = vpop.f32.mrf.mxu0
        %v1855 = vadd.f32 %v1726, %v1854
        %v1856 = vpop.f32.mrf.mxu0
        %1857 = vmatprep.mubr.f32.mxu0 0.0
        %1858 = vmatmul.mubr.f32.gmra.mxu0 %v1702
        %v1859 = vpop.f32.mrf.mxu0
        %v1860 = vadd.f32 %v1726, %v1859
        %v1861 = vpop.f32.mrf.mxu0
        %1862 = vmatprep.mubr.f32.mxu0 0.0
        %1863 = vmatmul.mubr.f32.gmra.mxu0 %v1703
        %v1864 = vpop.f32.mrf.mxu0
        %v1865 = vadd.f32 %v1726, %v1864
        %v1866 = vpop.f32.mrf.mxu0
        %1867 = vmatprep.mubr.f32.mxu0 0.0
        %1868 = vmatmul.mubr.f32.gmra.mxu0 %v1704
        %v1869 = vpop.f32.mrf.mxu0
        %v1870 = vadd.f32 %v1726, %v1869
        %v1871 = vpop.f32.mrf.mxu0
        %1872 = vdwg.mxu0
        %s1873 = scalar_lea.vmem [#allocation2], 16
        %v1874 = vld [vmem:[%s1873] sm:$0xff]
        %v1875 = vld [vmem:[%s1873 + $0x8] sm:$0xff]
        %v1876 = vld [vmem:[%s1873 + $0x10] sm:$0xff]
        %v1877 = vld [vmem:[%s1873 + $0x18] sm:$0xff]
        %v1878 = vld [vmem:[%s1873 + $0x20] sm:$0xff]
        %v1879 = vld [vmem:[%s1873 + $0x28] sm:$0xff]
        %v1880 = vld [vmem:[%s1873 + $0x30] sm:$0xff]
        %v1881 = vld [vmem:[%s1873 + $0x38] sm:$0xff]
        %v1882 = vld [vmem:[%s1873 + $0x40] sm:$0xff]
        %v1883 = vld [vmem:[%s1873 + $0x48] sm:$0xff]
        %v1884 = vld [vmem:[%s1873 + $0x50] sm:$0xff]
        %v1885 = vld [vmem:[%s1873 + $0x58] sm:$0xff]
        %v1886 = vld [vmem:[%s1873 + $0x60] sm:$0xff]
        %v1887 = vld [vmem:[%s1873 + $0x68] sm:$0xff]
        %v1888 = vld [vmem:[%s1873 + $0x70] sm:$0xff]
        %v1889 = vld [vmem:[%s1873 + $0x78] sm:$0xff]
        %v1890 = vadd.f32 %v1795, %v1874
        %v1891 = vadd.f32 %v1800, %v1875
        %v1892 = vadd.f32 %v1805, %v1876
        %v1893 = vadd.f32 %v1810, %v1877
        %v1894 = vadd.f32 %v1815, %v1878
        %v1895 = vadd.f32 %v1820, %v1879
        %v1896 = vadd.f32 %v1825, %v1880
        %v1897 = vadd.f32 %v1830, %v1881
        %v1898 = vadd.f32 %v1835, %v1882
        %v1899 = vadd.f32 %v1840, %v1883
        %v1900 = vadd.f32 %v1845, %v1884
        %v1901 = vadd.f32 %v1850, %v1885
        %v1902 = vadd.f32 %v1855, %v1886
        %v1903 = vadd.f32 %v1860, %v1887
        %v1904 = vadd.f32 %v1865, %v1888
        %v1905 = vadd.f32 %v1870, %v1889
        %v1906 = vmax.f32 %v1890, 0.0
        %v1907 = vmax.f32 %v1891, 0.0
        %v1908 = vmax.f32 %v1892, 0.0
        %v1909 = vmax.f32 %v1893, 0.0
        %v1910 = vmax.f32 %v1894, 0.0
        %v1911 = vmax.f32 %v1895, 0.0
        %v1912 = vmax.f32 %v1896, 0.0
        %v1913 = vmax.f32 %v1897, 0.0
        %v1914 = vmax.f32 %v1898, 0.0
        %v1915 = vmax.f32 %v1899, 0.0
        %v1916 = vmax.f32 %v1900, 0.0
        %v1917 = vmax.f32 %v1901, 0.0
        %v1918 = vmax.f32 %v1902, 0.0
        %v1919 = vmax.f32 %v1903, 0.0
        %v1920 = vmax.f32 %v1904, 0.0
        %v1921 = vmax.f32 %v1905, 0.0
        %1922 = vst [vmem:[%s288] sm:$0xff] %v1906
        %1923 = vst [vmem:[%s288 + $0x8] sm:$0xff] %v1907
        %1924 = vst [vmem:[%s288 + $0x10] sm:$0xff] %v1908
        %1925 = vst [vmem:[%s288 + $0x18] sm:$0xff] %v1909
        %1926 = vst [vmem:[%s288 + $0x20] sm:$0xff] %v1910
        %1927 = vst [vmem:[%s288 + $0x28] sm:$0xff] %v1911
        %1928 = vst [vmem:[%s288 + $0x30] sm:$0xff] %v1912
        %1929 = vst [vmem:[%s288 + $0x38] sm:$0xff] %v1913
        %1930 = vst [vmem:[%s288 + $0x40] sm:$0xff] %v1914
        %1931 = vst [vmem:[%s288 + $0x48] sm:$0xff] %v1915
        %1932 = vst [vmem:[%s288 + $0x50] sm:$0xff] %v1916
        %1933 = vst [vmem:[%s288 + $0x58] sm:$0xff] %v1917
        %1934 = vst [vmem:[%s288 + $0x60] sm:$0xff] %v1918
        %1935 = vst [vmem:[%s288 + $0x68] sm:$0xff] %v1919
        %1936 = vst [vmem:[%s288 + $0x70] sm:$0xff] %v1920
        %1937 = vst [vmem:[%s288 + $0x78] sm:$0xff] %v1921
        %s1938 = sand.u32 %s171, 1
        %s1939 = scalar_lea.sflag [#allocation7], %s1938
        %s1940 = sand.u32 %s171, 1
        %s1941 = smul.addr %s1940, 128
        %s1942 = scalar_lea.vmem [#allocation11], %s1941
        // Predicated region
        $region61: #{tpu_custom_call.1} parent=43 // pred_check
          %p1943 = pneg %p181
        $region62: #{tpu_custom_call.1} parent=43 // pred_check_branch
          %1945 = sbr.rel (%p1943) target = $region64
        $region63: #{tpu_custom_call.1} parent=43 // pred_region
          %s1946 = smul.u32 8, %s28
          %s1948 = ssub.s32 2048, 2048
          %1949 = vsyncadd %s1939, %s1948
          %s1950 = smul.addr %s1946, 2
          %s1951 = smul.addr %s27, 32
          %s1952 = sadd.s32 %s1950, %s1951
          %s1953 = smul.addr %s1952, 128
          %s1954 = scalar_lea.hbm %s7, %s1953
          %s1955 = sshll.u32 %s1942, 4
          %s1956 = int_to_ptr.vmem [resolvable:$true] %s1955
          %1961 = dma.vmem_to_hbm [thread:$0]  %s1956, 2048, %s1954, %s1939, 128, 128, 8
        $region64: #{tpu_custom_call.1} parent=43 // pred_fallthru
          _
      $region44: #{tpu_custom_call.1} parent=5 // pred_fallthru
        _
      %p1962 = scmp.le.s32.totalorder 2, %s18
      // Predicated region
      $region65: #{tpu_custom_call.1} parent=5 // pred_check
        %p1963 = pneg %p1962
      $region66: #{tpu_custom_call.1} parent=5 // pred_check_branch
        %1965 = sbr.rel (%p1963) target = $region68
      $region67: #{tpu_custom_call.1} parent=5 // pred_region
        %s1966 = ssub.s32 %s18, 2
        // Predicated region
        $region69: #{tpu_custom_call.1} parent=67 // pred_check
          %p1967 = pneg %p187
        $region70: #{tpu_custom_call.1} parent=67 // pred_check_branch
          %1969 = sbr.rel (%p1967) target = $region72
        $region71: #{tpu_custom_call.1} parent=67 // pred_region
          %s1970 = sand.u32 %s172, 1
          %s1971 = scalar_lea.sflag [#allocation7], %s1970
          %s1972 = sand.u32 %s172, 1
          %s1973 = smul.addr %s1972, 128
          %s1974 = scalar_lea.vmem [#allocation11], %s1973
          %1975 = dma.done %s1971, 2048
        $region72: #{tpu_custom_call.1} parent=67 // pred_fallthru
          _
      $region68: #{tpu_custom_call.1} parent=5 // pred_fallthru
        _
    $region6: #{tpu_custom_call.1} parent=1 // loop_footer
      %s22 = sadd.s32 1, %s18
    $region7: #{tpu_custom_call.1} parent=1 // loop_footer_branch
      %17 = sbr.rel target = $region3
    $region8: #{tpu_custom_call.1} parent=1 // loop_exit
      _
    %1976 = vsyncpa [#allocation6], 1
    %s1977 = scalar_lea.sflag [#allocation6], 1
    %1978 = vsyncpa %s1977, 1
    %1979 = vsyncpa [#allocation9], 1
    %1980 = vsyncpa [#allocation7], 1
    %s1981 = scalar_lea.sflag [#allocation7], 1
    %1982 = vsyncpa %s1981, 1
  %1983 = vsyncmov [#allocation4]
  %s1984 = vpop.sfrf %1983
  %p1985 = scmp.eq.s32.totalorder %s1984, 0
  %p1986 = pneg %p1985
  %1988 = shalt.err (%p1986)

</llo_original>
